<compile_context>
chip_gen: v7x
topology: tpu7x:2x2x1
jax: 0.10.0
libtpu: 0.0.40
codegen_flags: <defaults>
</compile_context>

<pallas_src>
import jax
import jax.numpy as jnp
import numpy as np
from jax.experimental import pallas as pl
from jax.experimental.pallas import tpu as pltpu


def _round_up(x, m):
    return (x + m - 1) // m * m


def _pad_to(x, shape, value=0.0):
    pads = [(0, t - s) for s, t in zip(x.shape, shape)]
    if all(p == (0, 0) for p in pads):
        return x
    return jnp.pad(x, pads, constant_values=value)


def _pointer_attn_kernel(dec_ref, enc_out_ref, enc_feat_ref, mask_ref, cov_ref,
                         wc_ref, v_ref,
                         ctx_ref, attn_ref, cov_out_ref):
    # One grid step == Bt batch rows.
    dec_fea = dec_ref[...]          # (Bt, D)   decode_proj(s_t) (precomputed)
    enc_feat = enc_feat_ref[...]    # (Bt, S, D)
    cov = cov_ref[...]              # (Bt, S)
    mask = mask_ref[...]            # (Bt, S)
    wc = wc_ref[...]                # (1, D)    W_c.weight (Linear(1, D), no bias)
    v_row = v_ref[...]              # (1, D)    v.weight   (Linear(D, 1), no bias)

    # att_features = encoder_feature + decode_proj(s_t) + W_c(coverage)
    att = enc_feat + dec_fea[:, None, :] + cov[:, :, None] * wc[None, :, :]
    e = jnp.tanh(att)                                   # (Bt, S, D)

    # scores = v(e): contraction over d_model; result is lane-dense (Bt, S).
    scores = jnp.sum(e * v_row[None, :, :], axis=-1)    # (Bt, S)

    # Fused masked softmax: softmax(scores)*mask / sum(softmax(scores)*mask)
    # == exp(scores-m)*mask / sum(exp(scores-m)*mask)  (inner denominator cancels).
    m = jnp.max(scores, axis=-1, keepdims=True)         # (Bt, 1)
    p = jnp.exp(scores - m) * mask                      # (Bt, S)
    denom = jnp.sum(p, axis=-1, keepdims=True)          # (Bt, 1)
    attn = p * pl.reciprocal(denom, approx=True)        # (Bt, S)

    # context vector on the MXU: (Bt,1,S) @ (Bt,S,D) -> (Bt,1,D)
    ctx = jnp.einsum('bqs,bsd->bqd', attn[:, None, :], enc_out_ref[...],
                     preferred_element_type=jnp.float32)

    ctx_ref[...] = ctx.astype(ctx_ref.dtype)
    attn_ref[...] = attn.astype(attn_ref.dtype)
    cov_out_ref[...] = (cov + attn).astype(cov_out_ref.dtype)


def pointer_attention(s_t, encoder_outputs, encoder_feature, enc_padding_mask,
                      coverage, params, *, block_b=8):
    """Forward pass of PointerAttention (do_coverage=True).

    block_b: batch rows per grid step. Keep >= 8 (sublane constraint on the 2-D
    (Bt, S) blocks) and size so 2 inputs x 2 buffers x Bt*S*D*4B fits the VMEM
    budget (halve relative to v5e/v6e when targeting v7x's 64 MiB VMEM).
    """
    B, S, D = encoder_outputs.shape
    f32 = jnp.float32

    # Hoist decode_proj out of the kernel: one properly-shaped MXU matmul in XLA.
    dec_fea = (s_t.astype(f32) @ params["decode_proj_w"].T.astype(f32)
               + params["decode_proj_b"].astype(f32))           # (B, D)

    wc = params["W_c_w"].reshape(1, D).astype(f32)              # Linear(1, D) weight
    v = params["v_w"].reshape(1, D).astype(f32)                 # Linear(D, 1) weight
    ef3 = encoder_feature.reshape(B, S, D)

    # TPU-friendly padding: batch -> multiple of Bt, seq -> multiple of 8
    # (sublanes), d_model -> multiple of 128 (lanes). Zero padding is exact:
    # padded d_model columns contribute 0 (wc/v padded with 0), padded seq
    # positions are masked out, padded batch rows are sliced off.
    Bt = max(8, int(block_b))
    Bp = _round_up(B, Bt)
    Sp = _round_up(S, 8)
    Dp = _round_up(D, 128)

    enc_out_p = _pad_to(encoder_outputs.astype(f32), (Bp, Sp, Dp))
    enc_feat_p = _pad_to(ef3.astype(f32), (Bp, Sp, Dp))
    dec_p = _pad_to(dec_fea, (Bp, Dp))
    cov_p = _pad_to(coverage.astype(f32), (Bp, Sp))
    wc_p = _pad_to(wc, (1, Dp))
    v_p = _pad_to(v, (1, Dp))
    # Mask: padded seq positions -> 0 (excluded); padded batch rows -> 1 so the
    # in-kernel normalization stays finite (those rows are discarded anyway).
    mask_p = _pad_to(enc_padding_mask.astype(f32), (B, Sp), value=0.0)
    if Bp > B:
        mask_p = jnp.concatenate([mask_p, jnp.ones((Bp - B, Sp), f32)], axis=0)

    grid = (Bp // Bt,)

    out_shapes = (
        jax.ShapeDtypeStruct((Bp, 1, Dp), f32),   # context_v
        jax.ShapeDtypeStruct((Bp, Sp), f32),      # attn_dist (lane-dense)
        jax.ShapeDtypeStruct((Bp, Sp), f32),      # coverage (updated, lane-dense)
    )

    ctx, attn, cov_out = pl.pallas_call(
        _pointer_attn_kernel,
        out_shape=out_shapes,
        grid_spec=pltpu.PrefetchScalarGridSpec(
            num_scalar_prefetch=0,
            grid=grid,
            in_specs=[
                pl.BlockSpec((Bt, Dp), lambda b: (b, 0)),          # dec_fea
                pl.BlockSpec((Bt, Sp, Dp), lambda b: (b, 0, 0)),   # encoder_outputs
                pl.BlockSpec((Bt, Sp, Dp), lambda b: (b, 0, 0)),   # encoder_feature
                pl.BlockSpec((Bt, Sp), lambda b: (b, 0)),          # enc_padding_mask
                pl.BlockSpec((Bt, Sp), lambda b: (b, 0)),          # coverage
                pl.BlockSpec((1, Dp), lambda b: (0, 0)),           # W_c weight
                pl.BlockSpec((1, Dp), lambda b: (0, 0)),           # v weight
            ],
            out_specs=[
                pl.BlockSpec((Bt, 1, Dp), lambda b: (b, 0, 0)),    # context_v
                pl.BlockSpec((Bt, Sp), lambda b: (b, 0)),          # attn_dist
                pl.BlockSpec((Bt, Sp), lambda b: (b, 0)),          # coverage
            ],
        ),
        compiler_params=pltpu.CompilerParams(
            dimension_semantics=("parallel",)),
    )(dec_p, enc_out_p, enc_feat_p, mask_p, cov_p, wc_p, v_p)

    context_v = ctx[:B, 0, :D]
    attn_dist = attn[:B, :S]
    coverage_new = cov_out[:B, :S]
    return context_v, attn_dist, coverage_new


def pointer_attention_ref(s_t, encoder_outputs, encoder_feature, enc_padding_mask,
                          coverage, params):
    """Pure-JAX reference mirroring the PyTorch forward (do_coverage=True)."""
    B, S, D = encoder_outputs.shape
    dec_fea = s_t @ params["decode_proj_w"].T + params["decode_proj_b"]      # (B, D)
    ef3 = encoder_feature.reshape(B, S, D)
    cov_feat = coverage[..., None] * params["W_c_w"].reshape(1, 1, D)        # (B, S, D)
    att = ef3 + dec_fea[:, None, :] + cov_feat
    e = jnp.tanh(att)
    scores = jnp.sum(e * params["v_w"].reshape(1, 1, D), axis=-1)            # (B, S)
    attn_ = jax.nn.softmax(scores, axis=1) * enc_padding_mask
    attn = attn_ / jnp.sum(attn_, axis=1, keepdims=True)
    context_v = jnp.einsum("bs,bsd->bd", attn, encoder_outputs)
    coverage_new = coverage + attn
    return context_v, attn, coverage_new


if __name__ == "__main__":
    # Deliberately unaligned small shapes: wrapper pads to B=16 (grid of 2 blocks
    # of 8 rows), S=16, D=128.
    B, S, D = 12, 12, 96

    key = jax.random.PRNGKey(0)
    k = jax.random.split(key, 8)

    params = {
        "decode_proj_w": 0.1 * jax.random.normal(k[0], (D, D), jnp.float32),
        "decode_proj_b": 0.1 * jax.random.normal(k[1], (D,), jnp.float32),
        "W_c_w": 0.1 * jax.random.normal(k[2], (D, 1), jnp.float32),   # nn.Linear(1, D)
        "v_w": 0.1 * jax.random.normal(k[3], (1, D), jnp.float32),     # nn.Linear(D, 1)
    }

    s_t = jax.random.normal(k[4], (B, D), jnp.float32)
    encoder_outputs = jax.random.normal(k[5], (B, S, D), jnp.float32)
    encoder_feature = jax.random.normal(k[6], (B * S, D), jnp.float32)
    # Variable-length padding mask: between 4 and S valid positions per row.
    lengths = (jnp.arange(B) % (S - 3)) + 4
    enc_padding_mask = (jnp.arange(S)[None, :] < lengths[:, None]).astype(jnp.float32)
    coverage = 0.05 * jax.random.uniform(k[7], (B, S), jnp.float32)

    ctx, attn, cov = pointer_attention(
        s_t, encoder_outputs, encoder_feature, enc_padding_mask, coverage, params)
    jax.block_until_ready((ctx, attn, cov))

    ctx_r, attn_r, cov_r = pointer_attention_ref(
        s_t, encoder_outputs, encoder_feature, enc_padding_mask, coverage, params)

    # Slightly loose tolerance: the kernel normalizes with the EUP approximate
    # reciprocal (pl.reciprocal(..., approx=True)).
    np.testing.assert_allclose(np.asarray(ctx), np.asarray(ctx_r), rtol=5e-3, atol=5e-3)
    np.testing.assert_allclose(np.asarray(attn), np.asarray(attn_r), rtol=5e-3, atol=5e-3)
    np.testing.assert_allclose(np.asarray(cov), np.asarray(cov_r), rtol=5e-3, atol=5e-3)

    print("KERNEL_OK")
</pallas_src>

<mosaic_0001>
module attributes {stable_mosaic.version = 11 : i64} {
  func.func @_pointer_attn_kernel(%arg0: i32, %arg1: memref<8x128xf32, #tpu.memory_space<vmem>>, %arg2: memref<8x16x128xf32, #tpu.memory_space<vmem>>, %arg3: memref<8x16x128xf32, #tpu.memory_space<vmem>>, %arg4: memref<8x16xf32, #tpu.memory_space<vmem>>, %arg5: memref<8x16xf32, #tpu.memory_space<vmem>>, %arg6: memref<1x128xf32, #tpu.memory_space<vmem>>, %arg7: memref<1x128xf32, #tpu.memory_space<vmem>>, %arg8: memref<8x1x128xf32, #tpu.memory_space<vmem>>, %arg9: memref<8x16xf32, #tpu.memory_space<vmem>>, %arg10: memref<8x16xf32, #tpu.memory_space<vmem>>) attributes {dimension_semantics = [#tpu.dimension_semantics<parallel>], iteration_bounds = array<i64: 2>, scalar_prefetch = 0 : i64, scratch_operands = 0 : i64, tpu.core_type = #tpu.core_type<tc>, window_params = [{transform_indices = @transform_0, window_bounds = array<i64: 8, 128>}, {transform_indices = @transform_1, window_bounds = array<i64: 8, 16, 128>}, {transform_indices = @transform_2, window_bounds = array<i64: 8, 16, 128>}, {transform_indices = @transform_3, window_bounds = array<i64: 8, 16>}, {transform_indices = @transform_4, window_bounds = array<i64: 8, 16>}, {pipeline_mode = #tpu.pipeline_mode<synchronous>, transform_indices = @transform_5, window_bounds = array<i64: 1, 128>}, {pipeline_mode = #tpu.pipeline_mode<synchronous>, transform_indices = @transform_6, window_bounds = array<i64: 1, 128>}, {transform_indices = @transform_7, window_bounds = array<i64: 8, 1, 128>}, {transform_indices = @transform_8, window_bounds = array<i64: 8, 16>}, {transform_indices = @transform_9, window_bounds = array<i64: 8, 16>}]} {
    %c0 = arith.constant 0 : index
    %c0_0 = arith.constant 0 : index
    %0 = vector.load %arg1[%c0, %c0_0] : memref<8x128xf32, #tpu.memory_space<vmem>>, vector<8x128xf32>
    %c0_1 = arith.constant 0 : index
    %c0_2 = arith.constant 0 : index
    %c0_3 = arith.constant 0 : index
    %1 = vector.load %arg3[%c0_1, %c0_2, %c0_3] : memref<8x16x128xf32, #tpu.memory_space<vmem>>, vector<8x16x128xf32>
    %c0_4 = arith.constant 0 : index
    %c0_5 = arith.constant 0 : index
    %2 = vector.load %arg5[%c0_4, %c0_5] : memref<8x16xf32, #tpu.memory_space<vmem>>, vector<8x16xf32>
    %c0_6 = arith.constant 0 : index
    %c0_7 = arith.constant 0 : index
    %3 = vector.load %arg4[%c0_6, %c0_7] : memref<8x16xf32, #tpu.memory_space<vmem>>, vector<8x16xf32>
    %c0_8 = arith.constant 0 : index
    %c0_9 = arith.constant 0 : index
    %4 = vector.load %arg6[%c0_8, %c0_9] : memref<1x128xf32, #tpu.memory_space<vmem>>, vector<1x128xf32>
    %c0_10 = arith.constant 0 : index
    %c0_11 = arith.constant 0 : index
    %5 = vector.load %arg7[%c0_10, %c0_11] : memref<1x128xf32, #tpu.memory_space<vmem>>, vector<1x128xf32>
    %6 = vector.shape_cast %0 : vector<8x128xf32> to vector<8x1x128xf32>
    %7 = vector.broadcast %6 : vector<8x1x128xf32> to vector<8x16x128xf32>
    %8 = arith.addf %1, %7 : vector<8x16x128xf32>
    %9 = vector.shape_cast %2 : vector<8x16xf32> to vector<8x16x1xf32>
    %10 = vector.shape_cast %4 : vector<1x128xf32> to vector<1x1x128xf32>
    %11 = vector.broadcast %9 : vector<8x16x1xf32> to vector<8x16x128xf32>
    %12 = vector.broadcast %10 : vector<1x1x128xf32> to vector<8x16x128xf32>
    %13 = arith.mulf %11, %12 : vector<8x16x128xf32>
    %14 = arith.addf %8, %13 : vector<8x16x128xf32>
    %15 = math.tanh %14 : vector<8x16x128xf32>
    %16 = vector.shape_cast %5 : vector<1x128xf32> to vector<1x1x128xf32>
    %17 = vector.broadcast %16 : vector<1x1x128xf32> to vector<8x16x128xf32>
    %18 = arith.mulf %15, %17 : vector<8x16x128xf32>
    %cst = arith.constant dense<0.000000e+00> : vector<8x16xf32>
    %19 = vector.multi_reduction <add>, %18, %cst [2] : vector<8x16x128xf32> to vector<8x16xf32>
    %cst_12 = arith.constant dense<0xFF800000> : vector<8xf32>
    %20 = vector.multi_reduction <maximumf>, %19, %cst_12 [1] : vector<8x16xf32> to vector<8xf32>
    %21 = vector.shape_cast %20 : vector<8xf32> to vector<8x1xf32>
    %22 = vector.broadcast %21 : vector<8x1xf32> to vector<8x16xf32>
    %23 = arith.subf %19, %22 : vector<8x16xf32>
    %24 = math.exp %23 : vector<8x16xf32>
    %25 = arith.mulf %24, %3 : vector<8x16xf32>
    %cst_13 = arith.constant dense<0.000000e+00> : vector<8xf32>
    %26 = vector.multi_reduction <add>, %25, %cst_13 [1] : vector<8x16xf32> to vector<8xf32>
    %27 = vector.shape_cast %26 : vector<8xf32> to vector<8x1xf32>
    %28 = tpu.reciprocal %27 {approx = true} : vector<8x1xf32> -> vector<8x1xf32>
    %29 = vector.broadcast %28 : vector<8x1xf32> to vector<8x16xf32>
    %30 = arith.mulf %25, %29 : vector<8x16xf32>
    %31 = vector.shape_cast %30 : vector<8x16xf32> to vector<8x1x16xf32>
    %c0_14 = arith.constant 0 : index
    %c0_15 = arith.constant 0 : index
    %c0_16 = arith.constant 0 : index
    %32 = vector.load %arg2[%c0_14, %c0_15, %c0_16] : memref<8x16x128xf32, #tpu.memory_space<vmem>>, vector<8x16x128xf32>
    "tpu.trace_start"() <{level = 10 : i32, message = "bqs,bsd->bqd"}> : () -> ()
    %cst_17 = arith.constant dense<0.000000e+00> : vector<8x1x128xf32>
    %33 = tpu.matmul %31, %32, %cst_17 {dimension_numbers = #tpu.dot_dimension_numbers<[2], [1], [1], [2], [0, 0, 0, 1, 1, 2], [0], [0]>} : vector<8x1x16xf32>, vector<8x16x128xf32>, vector<8x1x128xf32> -> vector<8x1x128xf32>
    "tpu.trace_stop"() : () -> ()
    %c0_18 = arith.constant 0 : index
    %c0_19 = arith.constant 0 : index
    %c0_20 = arith.constant 0 : index
    %34 = vector.load %arg8[%c0_18, %c0_19, %c0_20] : memref<8x1x128xf32, #tpu.memory_space<vmem>>, vector<8x1x128xf32>
    tpu.vector_store %arg8[%c0_18, %c0_19, %c0_20], %33 {strides = array<i32>} : memref<8x1x128xf32, #tpu.memory_space<vmem>>, vector<8x1x128xf32>,
    %c0_21 = arith.constant 0 : index
    %c0_22 = arith.constant 0 : index
    %35 = vector.load %arg9[%c0_21, %c0_22] : memref<8x16xf32, #tpu.memory_space<vmem>>, vector<8x16xf32>
    tpu.vector_store %arg9[%c0_21, %c0_22], %30 {strides = array<i32>} : memref<8x16xf32, #tpu.memory_space<vmem>>, vector<8x16xf32>,
    %36 = arith.addf %2, %30 : vector<8x16xf32>
    %c0_23 = arith.constant 0 : index
    %c0_24 = arith.constant 0 : index
    %37 = vector.load %arg10[%c0_23, %c0_24] : memref<8x16xf32, #tpu.memory_space<vmem>>, vector<8x16xf32>
    tpu.vector_store %arg10[%c0_23, %c0_24], %36 {strides = array<i32>} : memref<8x16xf32, #tpu.memory_space<vmem>>, vector<8x16xf32>,
    return
  }
  func.func @transform_0(%arg0: i32) -> (i32, i32) {
    %c0_i32 = arith.constant 0 : i32
    %c0_i32_0 = arith.constant 0 : i32
    return %arg0, %c0_i32 : i32, i32
  }
  func.func @transform_1(%arg0: i32) -> (i32, i32, i32) {
    %c0_i32 = arith.constant 0 : i32
    %c0_i32_0 = arith.constant 0 : i32
    %c0_i32_1 = arith.constant 0 : i32
    return %arg0, %c0_i32, %c0_i32_0 : i32, i32, i32
  }
  func.func @transform_2(%arg0: i32) -> (i32, i32, i32) {
    %c0_i32 = arith.constant 0 : i32
    %c0_i32_0 = arith.constant 0 : i32
    %c0_i32_1 = arith.constant 0 : i32
    return %arg0, %c0_i32, %c0_i32_0 : i32, i32, i32
  }
  func.func @transform_3(%arg0: i32) -> (i32, i32) {
    %c0_i32 = arith.constant 0 : i32
    %c0_i32_0 = arith.constant 0 : i32
    return %arg0, %c0_i32 : i32, i32
  }
  func.func @transform_4(%arg0: i32) -> (i32, i32) {
    %c0_i32 = arith.constant 0 : i32
    %c0_i32_0 = arith.constant 0 : i32
    return %arg0, %c0_i32 : i32, i32
  }
  func.func @transform_5(%arg0: i32) -> (i32, i32) {
    %c0_i32 = arith.constant 0 : i32
    %c0_i32_0 = arith.constant 0 : i32
    %c0_i32_1 = arith.constant 0 : i32
    return %c0_i32, %c0_i32_0 : i32, i32
  }
  func.func @transform_6(%arg0: i32) -> (i32, i32) {
    %c0_i32 = arith.constant 0 : i32
    %c0_i32_0 = arith.constant 0 : i32
    %c0_i32_1 = arith.constant 0 : i32
    return %c0_i32, %c0_i32_0 : i32, i32
  }
  func.func @transform_7(%arg0: i32) -> (i32, i32, i32) {
    %c0_i32 = arith.constant 0 : i32
    %c0_i32_0 = arith.constant 0 : i32
    %c0_i32_1 = arith.constant 0 : i32
    return %arg0, %c0_i32, %c0_i32_0 : i32, i32, i32
  }
  func.func @transform_8(%arg0: i32) -> (i32, i32) {
    %c0_i32 = arith.constant 0 : i32
    %c0_i32_0 = arith.constant 0 : i32
    return %arg0, %c0_i32 : i32, i32
  }
  func.func @transform_9(%arg0: i32) -> (i32, i32) {
    %c0_i32 = arith.constant 0 : i32
    %c0_i32_0 = arith.constant 0 : i32
    return %arg0, %c0_i32 : i32, i32
  }
}

</mosaic_0001>

<llo_original>
// kernel: tpu_custom_call.1
$region0: #{tpu_custom_call.1}
  #allocation0 [shape = 'u32[]', space=smem, size = 0x4, offset = 0x4, fixed_abs, tag = 'smem constant byte address 0x4 - core index']
  #allocation1 [shape = 'u32[144,128]{1,0:T(1,128)}', space=vmem, size = 0x12000, scoped, tag = 'internal scratch']
  %s0 = inlined_call_operand.hbm [shape: f32[16,128], index: 0, kind: input, shape index: {}]
  %s1 = inlined_call_operand.hbm [shape: f32[16,16,128], index: 1, kind: input, shape index: {}]
  %s2 = inlined_call_operand.hbm [shape: f32[16,16,128], index: 2, kind: input, shape index: {}]
  %s3 = inlined_call_operand.hbm [shape: f32[16,16], index: 3, kind: input, shape index: {}]
  %s4 = inlined_call_operand.hbm [shape: f32[16,16], index: 4, kind: input, shape index: {}]
  %s5 = inlined_call_operand.vmem [shape: f32[1,128], index: 5, kind: input, shape index: {}]
  %s6 = inlined_call_operand.vmem [shape: f32[1,128], index: 6, kind: input, shape index: {}]
  %s7 = inlined_call_operand.hbm [shape: f32[16,1,128], index: 7, kind: output, shape index: {0}]
  %s8 = inlined_call_operand.hbm [shape: f32[16,16], index: 8, kind: output, shape index: {1}]
  %s9 = inlined_call_operand.hbm [shape: f32[16,16], index: 9, kind: output, shape index: {2}]
  %10 = xla_tuple %s7, %s8, %s9
  %s11 = sld [smem:[#allocation0]]
  $region97: #{tpu_custom_call.1} parent=0
    _
  %s13 = ssub.s32 1, %s11
  %s14 = scalar_select 0, %s13, %s11
  $region1: #{tpu_custom_call.1} parent=0
    #allocation2 [shape = 'u8[8192]{0}', space=vmem, size = 0x2000, scoped, tag = 'input window, operand 0']
    #allocation3 [shape = 's32[2]{0}', space=sflag, size = 0x8, scoped, tag = 'scoped memory for tpu_custom_call.1']
    #allocation4 [shape = 's32[2]{0}', space=sflag, size = 0x8, scoped, tag = 'scoped memory for tpu_custom_call.1']
    #allocation5 [shape = 'u8[131072]{0}', space=vmem, size = 0x20000, scoped, tag = 'input window, operand 1']
    #allocation6 [shape = 's32[2]{0}', space=sflag, size = 0x8, scoped, tag = 'scoped memory for tpu_custom_call.1']
    #allocation7 [shape = 'u8[131072]{0}', space=vmem, size = 0x20000, scoped, tag = 'input window, operand 2']
    #allocation8 [shape = 'u8[8192]{0}', space=vmem, size = 0x2000, scoped, tag = 'input window, operand 3']
    #allocation9 [shape = 's32[2]{0}', space=sflag, size = 0x8, scoped, tag = 'scoped memory for tpu_custom_call.1']
    #allocation10 [shape = 'u8[8192]{0}', space=vmem, size = 0x2000, scoped, tag = 'input window, operand 4']
    #allocation11 [shape = 'u8[8192]{0}', space=vmem, size = 0x2000, scoped, tag = 'output window, operand 0']
    #allocation12 [shape = 'u8[8192]{0}', space=vmem, size = 0x2000, scoped, tag = 'output window, operand 1']
    #allocation13 [shape = 's32[2]{0}', space=sflag, size = 0x8, scoped, tag = 'scoped memory for tpu_custom_call.1']
    #allocation14 [shape = 'u8[8192]{0}', space=vmem, size = 0x2000, scoped, tag = 'output window, operand 2']
    %15 = vsyncpa [#allocation3], 0
    %s16 = scalar_lea.sflag [#allocation3], 1
    %17 = vsyncpa %s16, 0
    %18 = vsyncpa [#allocation6], 0
    %s19 = scalar_lea.sflag [#allocation6], 1
    %20 = vsyncpa %s19, 0
    %21 = vsyncpa [#allocation9], 0
    %s22 = scalar_lea.sflag [#allocation9], 1
    %23 = vsyncpa %s22, 0
    %24 = vsyncpa [#allocation4], 0
    %s25 = scalar_lea.sflag [#allocation4], 1
    %26 = vsyncpa %s25, 0
    %27 = vsyncpa [#allocation13], 0
    %s28 = scalar_lea.sflag [#allocation13], 1
    %29 = vsyncpa %s28, 0
    loop: start=0, step=1, limit=4
    $region2: #{tpu_custom_call.1} parent=1 // loop_pre_header
      _
    $region3: #{tpu_custom_call.1} parent=1 // loop_header
      %s31 = sphi 0, %s35
      %p32 = scmp.ge.s32.totalorder %s31, 4
      %s41 = sphi 0, %s43
      %s44 = sphi 0, %s41
      %s45 = sphi 0, %s44
      %s61 = sphi 0, %s45
      %s67 = sphi 0, %s69
      %s70 = sphi 0, %s67
      %s71 = sphi 0, %s70
      %s87 = sphi 0, %s71
      %s93 = sphi 0, %s95
      %s96 = sphi 0, %s93
      %s97 = sphi 0, %s96
      %s113 = sphi 0, %s97
      %s119 = sphi 0, %s121
      %s122 = sphi 0, %s119
      %s123 = sphi 0, %s122
      %s139 = sphi 0, %s123
      %s145 = sphi 0, %s147
      %s148 = sphi 0, %s145
      %s149 = sphi 0, %s148
      %s165 = sphi 0, %s149
      %s169 = sphi 0, %s169
      %s171 = sphi 0, %s169
      %s172 = sphi 0, %s171
      %s186 = sphi 0, %s172
      %s190 = sphi 0, %s190
      %s192 = sphi 0, %s190
      %s193 = sphi 0, %s192
      %s207 = sphi 0, %s193
      %s213 = sphi 0, %s215
      %s216 = sphi 0, %s213
      %s217 = sphi 0, %s216
      %s233 = sphi 0, %s217
      %s239 = sphi 0, %s241
      %s242 = sphi 0, %s239
      %s243 = sphi 0, %s242
      %s259 = sphi 0, %s243
      %s265 = sphi 0, %s267
      %s268 = sphi 0, %s265
      %s269 = sphi 0, %s268
      %s285 = sphi 0, %s269
    $region4: #{tpu_custom_call.1} parent=1 // loop_header_branch
      %34 = sbr.rel (%p32) target = $region8
    $region5: #{tpu_custom_call.1} parent=1 // loop_body
      %s36 = ssub.s32 %s31, 1
      %s37 = ssub.s32 %s31, 2
      %s38 = sadd.s32 %s31, 1
      %s39 = ssub.s32 %s31, %s38
      %p40 = scmp.eq.s32.totalorder %s39, 0
      %s42 = sadd.s32 %s41, 1
      %s43 = scalar_select %p40, %s41, %s42
      %p46 = pneg %p40
      %p47 = scmp.eq.s32.totalorder %s31, 1
      %p48 = por %p46, %p47
      %p49 = scmp.ne.s32.totalorder %s41, %s44
      %p50 = scmp.eq.s32.totalorder %s31, 0
      %p51 = por %p49, %p50
      %p52 = scmp.ne.s32.totalorder %s41, %s44
      %p53 = scmp.eq.s32.totalorder %s36, 1
      %p54 = por %p52, %p53
      %p55 = scmp.ne.s32.totalorder %s44, %s45
      %p56 = scmp.eq.s32.totalorder %s36, 0
      %p57 = por %p55, %p56
      %p58 = scmp.ne.s32.totalorder %s44, %s45
      %p59 = scmp.eq.s32.totalorder %s37, 1
      %p60 = por %p58, %p59
      %p62 = scmp.ne.s32.totalorder %s45, %s61
      %p63 = scmp.eq.s32.totalorder %s37, 0
      %p64 = por %p62, %p63
      %s65 = ssub.s32 %s31, %s38
      %p66 = scmp.eq.s32.totalorder %s65, 0
      %s68 = sadd.s32 %s67, 1
      %s69 = scalar_select %p66, %s67, %s68
      %p72 = pneg %p66
      %p73 = scmp.eq.s32.totalorder %s31, 1
      %p74 = por %p72, %p73
      %p75 = scmp.ne.s32.totalorder %s67, %s70
      %p76 = scmp.eq.s32.totalorder %s31, 0
      %p77 = por %p75, %p76
      %p78 = scmp.ne.s32.totalorder %s67, %s70
      %p79 = scmp.eq.s32.totalorder %s36, 1
      %p80 = por %p78, %p79
      %p81 = scmp.ne.s32.totalorder %s70, %s71
      %p82 = scmp.eq.s32.totalorder %s36, 0
      %p83 = por %p81, %p82
      %p84 = scmp.ne.s32.totalorder %s70, %s71
      %p85 = scmp.eq.s32.totalorder %s37, 1
      %p86 = por %p84, %p85
      %p88 = scmp.ne.s32.totalorder %s71, %s87
      %p89 = scmp.eq.s32.totalorder %s37, 0
      %p90 = por %p88, %p89
      %s91 = ssub.s32 %s31, %s38
      %p92 = scmp.eq.s32.totalorder %s91, 0
      %s94 = sadd.s32 %s93, 1
      %s95 = scalar_select %p92, %s93, %s94
      %p98 = pneg %p92
      %p99 = scmp.eq.s32.totalorder %s31, 1
      %p100 = por %p98, %p99
      %p101 = scmp.ne.s32.totalorder %s93, %s96
      %p102 = scmp.eq.s32.totalorder %s31, 0
      %p103 = por %p101, %p102
      %p104 = scmp.ne.s32.totalorder %s93, %s96
      %p105 = scmp.eq.s32.totalorder %s36, 1
      %p106 = por %p104, %p105
      %p107 = scmp.ne.s32.totalorder %s96, %s97
      %p108 = scmp.eq.s32.totalorder %s36, 0
      %p109 = por %p107, %p108
      %p110 = scmp.ne.s32.totalorder %s96, %s97
      %p111 = scmp.eq.s32.totalorder %s37, 1
      %p112 = por %p110, %p111
      %p114 = scmp.ne.s32.totalorder %s97, %s113
      %p115 = scmp.eq.s32.totalorder %s37, 0
      %p116 = por %p114, %p115
      %s117 = ssub.s32 %s31, %s38
      %p118 = scmp.eq.s32.totalorder %s117, 0
      %s120 = sadd.s32 %s119, 1
      %s121 = scalar_select %p118, %s119, %s120
      %p124 = pneg %p118
      %p125 = scmp.eq.s32.totalorder %s31, 1
      %p126 = por %p124, %p125
      %p127 = scmp.ne.s32.totalorder %s119, %s122
      %p128 = scmp.eq.s32.totalorder %s31, 0
      %p129 = por %p127, %p128
      %p130 = scmp.ne.s32.totalorder %s119, %s122
      %p131 = scmp.eq.s32.totalorder %s36, 1
      %p132 = por %p130, %p131
      %p133 = scmp.ne.s32.totalorder %s122, %s123
      %p134 = scmp.eq.s32.totalorder %s36, 0
      %p135 = por %p133, %p134
      %p136 = scmp.ne.s32.totalorder %s122, %s123
      %p137 = scmp.eq.s32.totalorder %s37, 1
      %p138 = por %p136, %p137
      %p140 = scmp.ne.s32.totalorder %s123, %s139
      %p141 = scmp.eq.s32.totalorder %s37, 0
      %p142 = por %p140, %p141
      %s143 = ssub.s32 %s31, %s38
      %p144 = scmp.eq.s32.totalorder %s143, 0
      %s146 = sadd.s32 %s145, 1
      %s147 = scalar_select %p144, %s145, %s146
      %p150 = pneg %p144
      %p151 = scmp.eq.s32.totalorder %s31, 1
      %p152 = por %p150, %p151
      %p153 = scmp.ne.s32.totalorder %s145, %s148
      %p154 = scmp.eq.s32.totalorder %s31, 0
      %p155 = por %p153, %p154
      %p156 = scmp.ne.s32.totalorder %s145, %s148
      %p157 = scmp.eq.s32.totalorder %s36, 1
      %p158 = por %p156, %p157
      %p159 = scmp.ne.s32.totalorder %s148, %s149
      %p160 = scmp.eq.s32.totalorder %s36, 0
      %p161 = por %p159, %p160
      %p162 = scmp.ne.s32.totalorder %s148, %s149
      %p163 = scmp.eq.s32.totalorder %s37, 1
      %p164 = por %p162, %p163
      %p166 = scmp.ne.s32.totalorder %s149, %s165
      %p167 = scmp.eq.s32.totalorder %s37, 0
      %p168 = por %p166, %p167
      %s170 = sadd.s32 %s169, 1
      %p173 = scmp.eq.s32.totalorder %s31, 1
      %p174 = scmp.ne.s32.totalorder %s169, %s171
      %p175 = scmp.eq.s32.totalorder %s31, 0
      %p176 = por %p174, %p175
      %p177 = scmp.ne.s32.totalorder %s169, %s171
      %p178 = scmp.eq.s32.totalorder %s36, 1
      %p179 = por %p177, %p178
      %p180 = scmp.ne.s32.totalorder %s171, %s172
      %p181 = scmp.eq.s32.totalorder %s36, 0
      %p182 = por %p180, %p181
      %p183 = scmp.ne.s32.totalorder %s171, %s172
      %p184 = scmp.eq.s32.totalorder %s37, 1
      %p185 = por %p183, %p184
      %p187 = scmp.ne.s32.totalorder %s172, %s186
      %p188 = scmp.eq.s32.totalorder %s37, 0
      %p189 = por %p187, %p188
      %s191 = sadd.s32 %s190, 1
      %p194 = scmp.eq.s32.totalorder %s31, 1
      %p195 = scmp.ne.s32.totalorder %s190, %s192
      %p196 = scmp.eq.s32.totalorder %s31, 0
      %p197 = por %p195, %p196
      %p198 = scmp.ne.s32.totalorder %s190, %s192
      %p199 = scmp.eq.s32.totalorder %s36, 1
      %p200 = por %p198, %p199
      %p201 = scmp.ne.s32.totalorder %s192, %s193
      %p202 = scmp.eq.s32.totalorder %s36, 0
      %p203 = por %p201, %p202
      %p204 = scmp.ne.s32.totalorder %s192, %s193
      %p205 = scmp.eq.s32.totalorder %s37, 1
      %p206 = por %p204, %p205
      %p208 = scmp.ne.s32.totalorder %s193, %s207
      %p209 = scmp.eq.s32.totalorder %s37, 0
      %p210 = por %p208, %p209
      %s211 = ssub.s32 %s31, %s38
      %p212 = scmp.eq.s32.totalorder %s211, 0
      %s214 = sadd.s32 %s213, 1
      %s215 = scalar_select %p212, %s213, %s214
      %p218 = pneg %p212
      %p219 = scmp.eq.s32.totalorder %s31, 1
      %p220 = por %p218, %p219
      %p221 = scmp.ne.s32.totalorder %s213, %s216
      %p222 = scmp.eq.s32.totalorder %s31, 0
      %p223 = por %p221, %p222
      %p224 = scmp.ne.s32.totalorder %s213, %s216
      %p225 = scmp.eq.s32.totalorder %s36, 1
      %p226 = por %p224, %p225
      %p227 = scmp.ne.s32.totalorder %s216, %s217
      %p228 = scmp.eq.s32.totalorder %s36, 0
      %p229 = por %p227, %p228
      %p230 = scmp.ne.s32.totalorder %s216, %s217
      %p231 = scmp.eq.s32.totalorder %s37, 1
      %p232 = por %p230, %p231
      %p234 = scmp.ne.s32.totalorder %s217, %s233
      %p235 = scmp.eq.s32.totalorder %s37, 0
      %p236 = por %p234, %p235
      %s237 = ssub.s32 %s31, %s38
      %p238 = scmp.eq.s32.totalorder %s237, 0
      %s240 = sadd.s32 %s239, 1
      %s241 = scalar_select %p238, %s239, %s240
      %p244 = pneg %p238
      %p245 = scmp.eq.s32.totalorder %s31, 1
      %p246 = por %p244, %p245
      %p247 = scmp.ne.s32.totalorder %s239, %s242
      %p248 = scmp.eq.s32.totalorder %s31, 0
      %p249 = por %p247, %p248
      %p250 = scmp.ne.s32.totalorder %s239, %s242
      %p251 = scmp.eq.s32.totalorder %s36, 1
      %p252 = por %p250, %p251
      %p253 = scmp.ne.s32.totalorder %s242, %s243
      %p254 = scmp.eq.s32.totalorder %s36, 0
      %p255 = por %p253, %p254
      %p256 = scmp.ne.s32.totalorder %s242, %s243
      %p257 = scmp.eq.s32.totalorder %s37, 1
      %p258 = por %p256, %p257
      %p260 = scmp.ne.s32.totalorder %s243, %s259
      %p261 = scmp.eq.s32.totalorder %s37, 0
      %p262 = por %p260, %p261
      %s263 = ssub.s32 %s31, %s38
      %p264 = scmp.eq.s32.totalorder %s263, 0
      %s266 = sadd.s32 %s265, 1
      %s267 = scalar_select %p264, %s265, %s266
      %p270 = pneg %p264
      %p271 = scmp.eq.s32.totalorder %s31, 1
      %p272 = por %p270, %p271
      %p273 = scmp.ne.s32.totalorder %s265, %s268
      %p274 = scmp.eq.s32.totalorder %s31, 0
      %p275 = por %p273, %p274
      %p276 = scmp.ne.s32.totalorder %s265, %s268
      %p277 = scmp.eq.s32.totalorder %s36, 1
      %p278 = por %p276, %p277
      %p279 = scmp.ne.s32.totalorder %s268, %s269
      %p280 = scmp.eq.s32.totalorder %s36, 0
      %p281 = por %p279, %p280
      %p282 = scmp.ne.s32.totalorder %s268, %s269
      %p283 = scmp.eq.s32.totalorder %s37, 1
      %p284 = por %p282, %p283
      %p286 = scmp.ne.s32.totalorder %s269, %s285
      %p287 = scmp.eq.s32.totalorder %s37, 0
      %p288 = por %p286, %p287
      %p289 = scmp.le.s32.totalorder 1, %s31
      %p290 = scmp.lt.s32.totalorder %s31, 3
      %p291 = pnand %p289, %p290
      %p292 = pneg %p291
      // Predicated region
      $region9: #{tpu_custom_call.1} parent=5 // pred_check
        _
      $region10: #{tpu_custom_call.1} parent=5 // pred_check_branch
        %294 = sbr.rel (%p291) target = $region12
      $region11: #{tpu_custom_call.1} parent=5 // pred_region
        %s295 = ssub.s32 %s31, 1
        // Predicated region
        $region13: #{tpu_custom_call.1} parent=11 // pred_check
          %p296 = pneg %p182
        $region14: #{tpu_custom_call.1} parent=11 // pred_check_branch
          %298 = sbr.rel (%p296) target = $region16
        $region15: #{tpu_custom_call.1} parent=11 // pred_region
          _
        $region16: #{tpu_custom_call.1} parent=11 // pred_fallthru
          _
        // Predicated region
        $region17: #{tpu_custom_call.1} parent=11 // pred_check
          %p299 = pneg %p203
        $region18: #{tpu_custom_call.1} parent=11 // pred_check_branch
          %301 = sbr.rel (%p299) target = $region20
        $region19: #{tpu_custom_call.1} parent=11 // pred_region
          _
        $region20: #{tpu_custom_call.1} parent=11 // pred_fallthru
          _
      $region12: #{tpu_custom_call.1} parent=5 // pred_fallthru
        _
      %p302 = scmp.lt.s32.totalorder %s31, 2
      // Predicated region
      $region21: #{tpu_custom_call.1} parent=5 // pred_check
        %p303 = pneg %p302
      $region22: #{tpu_custom_call.1} parent=5 // pred_check_branch
        %305 = sbr.rel (%p303) target = $region24
      $region23: #{tpu_custom_call.1} parent=5 // pred_region
        // Predicated region
        $region25: #{tpu_custom_call.1} parent=23 // pred_check
          %p306 = pneg %p51
        $region26: #{tpu_custom_call.1} parent=23 // pred_check_branch
          %308 = sbr.rel (%p306) target = $region28
        $region27: #{tpu_custom_call.1} parent=23 // pred_region
          %s309 = sand.u32 %s41, 1
          %s310 = scalar_lea.sflag [#allocation3], %s309
          %s311 = sand.u32 %s41, 1
          %s312 = smul.addr %s311, 8
          %s313 = scalar_lea.vmem [#allocation2], %s312
          %s315 = ssub.s32 128, 128
          %316 = vsyncadd %s310, %s315
          %s317 = smul.addr %s31, 128
          %s318 = scalar_lea.hbm %s0, %s317
          %s320 = sshll.u32 %s313, 4
          %s321 = int_to_ptr.vmem [resolvable:$true] %s320
          %323 = dma.hbm_to_vmem [thread:$0]  %s318, 128, %s321, %s310
        $region28: #{tpu_custom_call.1} parent=23 // pred_fallthru
          _
        // Predicated region
        $region29: #{tpu_custom_call.1} parent=23 // pred_check
          %p324 = pneg %p77
        $region30: #{tpu_custom_call.1} parent=23 // pred_check_branch
          %326 = sbr.rel (%p324) target = $region32
        $region31: #{tpu_custom_call.1} parent=23 // pred_region
          %s327 = sand.u32 %s31, 1
          %s328 = scalar_lea.sflag [#allocation6], %s327
          %s329 = sand.u32 %s67, 1
          %s330 = smul.addr %s329, 128
          %s331 = scalar_lea.vmem [#allocation5], %s330
          %s332 = smul.u32 8, %s31
          %s334 = ssub.s32 2048, 2048
          %335 = vsyncadd %s328, %s334
          %s336 = smul.addr %s332, 2
          %s337 = smul.addr %s336, 128
          %s338 = scalar_lea.hbm %s1, %s337
          %s339 = sshll.u32 %s331, 4
          %s340 = int_to_ptr.vmem [resolvable:$true] %s339
          %345 = dma.hbm_to_vmem [thread:$0]  %s338, 2048, %s340, %s328, 128, 128, 8
        $region32: #{tpu_custom_call.1} parent=23 // pred_fallthru
          _
        // Predicated region
        $region33: #{tpu_custom_call.1} parent=23 // pred_check
          %p346 = pneg %p103
        $region34: #{tpu_custom_call.1} parent=23 // pred_check_branch
          %348 = sbr.rel (%p346) target = $region36
        $region35: #{tpu_custom_call.1} parent=23 // pred_region
          %s349 = sand.u32 %s31, 1
          %s350 = scalar_lea.sflag [#allocation6], %s349
          %s351 = sand.u32 %s93, 1
          %s352 = smul.addr %s351, 128
          %s353 = scalar_lea.vmem [#allocation7], %s352
          %s354 = smul.u32 8, %s31
          %s356 = ssub.s32 2048, 2048
          %357 = vsyncadd %s350, %s356
          %s358 = smul.addr %s354, 2
          %s359 = smul.addr %s358, 128
          %s360 = scalar_lea.hbm %s2, %s359
          %s361 = sshll.u32 %s353, 4
          %s362 = int_to_ptr.vmem [resolvable:$true] %s361
          %367 = dma.hbm_to_vmem [thread:$0]  %s360, 2048, %s362, %s350, 128, 128, 8
        $region36: #{tpu_custom_call.1} parent=23 // pred_fallthru
          _
        // Predicated region
        $region37: #{tpu_custom_call.1} parent=23 // pred_check
          %p368 = pneg %p129
        $region38: #{tpu_custom_call.1} parent=23 // pred_check_branch
          %370 = sbr.rel (%p368) target = $region40
        $region39: #{tpu_custom_call.1} parent=23 // pred_region
          %s371 = sand.u32 %s31, 1
          %s372 = scalar_lea.sflag [#allocation9], %s371
          %s373 = sand.u32 %s119, 1
          %s374 = smul.addr %s373, 8
          %s375 = scalar_lea.vmem [#allocation8], %s374
          %s377 = ssub.s32 128, 128
          %378 = vsyncadd %s372, %s377
          %s379 = smul.addr %s31, 128
          %s380 = scalar_lea.hbm %s3, %s379
          %s382 = sshll.u32 %s375, 4
          %s383 = int_to_ptr.vmem [resolvable:$true] %s382
          %385 = dma.hbm_to_vmem [thread:$0]  %s380, 128, %s383, %s372
        $region40: #{tpu_custom_call.1} parent=23 // pred_fallthru
          _
        // Predicated region
        $region41: #{tpu_custom_call.1} parent=23 // pred_check
          %p386 = pneg %p155
        $region42: #{tpu_custom_call.1} parent=23 // pred_check_branch
          %388 = sbr.rel (%p386) target = $region44
        $region43: #{tpu_custom_call.1} parent=23 // pred_region
          %s389 = sand.u32 %s31, 1
          %s390 = scalar_lea.sflag [#allocation9], %s389
          %s391 = sand.u32 %s145, 1
          %s392 = smul.addr %s391, 8
          %s393 = scalar_lea.vmem [#allocation10], %s392
          %s395 = ssub.s32 128, 128
          %396 = vsyncadd %s390, %s395
          %s397 = smul.addr %s31, 128
          %s398 = scalar_lea.hbm %s4, %s397
          %s400 = sshll.u32 %s393, 4
          %s401 = int_to_ptr.vmem [resolvable:$true] %s400
          %403 = dma.hbm_to_vmem [thread:$0]  %s398, 128, %s401, %s390
        $region44: #{tpu_custom_call.1} parent=23 // pred_fallthru
          _
      $region24: #{tpu_custom_call.1} parent=5 // pred_fallthru
        _
      %p404 = scmp.le.s32.totalorder 1, %s31
      %p405 = scmp.lt.s32.totalorder %s31, 3
      %p406 = pnand %p404, %p405
      %p407 = pneg %p406
      // Predicated region
      $region45: #{tpu_custom_call.1} parent=5 // pred_check
        _
      $region46: #{tpu_custom_call.1} parent=5 // pred_check_branch
        %409 = sbr.rel (%p406) target = $region48
      $region47: #{tpu_custom_call.1} parent=5 // pred_region
        %s410 = ssub.s32 %s31, 1
        %s411 = sand.u32 %s44, 1
        %s412 = scalar_lea.sflag [#allocation3], %s411
        %s413 = sand.u32 %s44, 1
        %s414 = smul.addr %s413, 8
        %s415 = scalar_lea.vmem [#allocation2], %s414
        // Predicated region
        $region49: #{tpu_custom_call.1} parent=47 // pred_check
          %p416 = pneg %p57
        $region50: #{tpu_custom_call.1} parent=47 // pred_check_branch
          %418 = sbr.rel (%p416) target = $region52
        $region51: #{tpu_custom_call.1} parent=47 // pred_region
          %419 = dma.done %s412, 128
        $region52: #{tpu_custom_call.1} parent=47 // pred_fallthru
          _
        %s420 = sand.u32 %s36, 1
        %s421 = scalar_lea.sflag [#allocation6], %s420
        %s422 = sand.u32 %s70, 1
        %s423 = smul.addr %s422, 128
        %s424 = scalar_lea.vmem [#allocation5], %s423
        // Predicated region
        $region53: #{tpu_custom_call.1} parent=47 // pred_check
          %p425 = pneg %p83
        $region54: #{tpu_custom_call.1} parent=47 // pred_check_branch
          %427 = sbr.rel (%p425) target = $region56
        $region55: #{tpu_custom_call.1} parent=47 // pred_region
          %428 = dma.done %s421, 2048
        $region56: #{tpu_custom_call.1} parent=47 // pred_fallthru
          _
        %s429 = sand.u32 %s36, 1
        %s430 = scalar_lea.sflag [#allocation6], %s429
        %s431 = sand.u32 %s96, 1
        %s432 = smul.addr %s431, 128
        %s433 = scalar_lea.vmem [#allocation7], %s432
        // Predicated region
        $region57: #{tpu_custom_call.1} parent=47 // pred_check
          %p434 = pneg %p109
        $region58: #{tpu_custom_call.1} parent=47 // pred_check_branch
          %436 = sbr.rel (%p434) target = $region60
        $region59: #{tpu_custom_call.1} parent=47 // pred_region
          %437 = dma.done %s430, 2048
        $region60: #{tpu_custom_call.1} parent=47 // pred_fallthru
          _
        %s438 = sand.u32 %s36, 1
        %s439 = scalar_lea.sflag [#allocation9], %s438
        %s440 = sand.u32 %s122, 1
        %s441 = smul.addr %s440, 8
        %s442 = scalar_lea.vmem [#allocation8], %s441
        // Predicated region
        $region61: #{tpu_custom_call.1} parent=47 // pred_check
          %p443 = pneg %p135
        $region62: #{tpu_custom_call.1} parent=47 // pred_check_branch
          %445 = sbr.rel (%p443) target = $region64
        $region63: #{tpu_custom_call.1} parent=47 // pred_region
          %446 = dma.done %s439, 128
        $region64: #{tpu_custom_call.1} parent=47 // pred_fallthru
          _
        %s447 = sand.u32 %s36, 1
        %s448 = scalar_lea.sflag [#allocation9], %s447
        %s449 = sand.u32 %s148, 1
        %s450 = smul.addr %s449, 8
        %s451 = scalar_lea.vmem [#allocation10], %s450
        // Predicated region
        $region65: #{tpu_custom_call.1} parent=47 // pred_check
          %p452 = pneg %p161
        $region66: #{tpu_custom_call.1} parent=47 // pred_check_branch
          %454 = sbr.rel (%p452) target = $region68
        $region67: #{tpu_custom_call.1} parent=47 // pred_region
          %455 = dma.done %s448, 128
        $region68: #{tpu_custom_call.1} parent=47 // pred_fallthru
          _
        %s456 = sand.u32 %s44, 1
        %s457 = scalar_lea.sflag [#allocation3], %s456
        %s458 = sand.u32 %s44, 1
        %s459 = smul.addr %s458, 8
        %s460 = scalar_lea.vmem [#allocation2], %s459
        %p461 = pneg %p57
        %p462 = pneg %p54
        %s463 = sand.u32 %s36, 1
        %s464 = scalar_lea.sflag [#allocation6], %s463
        %s465 = sand.u32 %s70, 1
        %s466 = smul.addr %s465, 128
        %s467 = scalar_lea.vmem [#allocation5], %s466
        %p468 = pneg %p83
        %p469 = pneg %p80
        %s470 = sand.u32 %s36, 1
        %s471 = scalar_lea.sflag [#allocation6], %s470
        %s472 = sand.u32 %s96, 1
        %s473 = smul.addr %s472, 128
        %s474 = scalar_lea.vmem [#allocation7], %s473
        %p475 = pneg %p109
        %p476 = pneg %p106
        %s477 = sand.u32 %s36, 1
        %s478 = scalar_lea.sflag [#allocation9], %s477
        %s479 = sand.u32 %s122, 1
        %s480 = smul.addr %s479, 8
        %s481 = scalar_lea.vmem [#allocation8], %s480
        %p482 = pneg %p135
        %p483 = pneg %p132
        %s484 = sand.u32 %s36, 1
        %s485 = scalar_lea.sflag [#allocation9], %s484
        %s486 = sand.u32 %s148, 1
        %s487 = smul.addr %s486, 8
        %s488 = scalar_lea.vmem [#allocation10], %s487
        %p489 = pneg %p161
        %p490 = pneg %p158
        %p491 = pneg %p182
        %p492 = pneg %p179
        %p493 = pneg %p203
        %p494 = pneg %p200
        %p495 = pneg %p229
        %p496 = pneg %p226
        %s497 = sand.u32 %s216, 1
        %s498 = scalar_lea.sflag [#allocation4], %s497
        %s499 = sand.u32 %s216, 1
        %s500 = smul.addr %s499, 8
        %s501 = scalar_lea.vmem [#allocation11], %s500
        %p502 = pneg %p255
        %p503 = pneg %p252
        %s504 = sand.u32 %s36, 1
        %s505 = scalar_lea.sflag [#allocation13], %s504
        %s506 = sand.u32 %s242, 1
        %s507 = smul.addr %s506, 8
        %s508 = scalar_lea.vmem [#allocation12], %s507
        %p509 = pneg %p281
        %p510 = pneg %p278
        %s511 = sand.u32 %s36, 1
        %s512 = scalar_lea.sflag [#allocation13], %s511
        %s513 = sand.u32 %s268, 1
        %s514 = smul.addr %s513, 8
        %s515 = scalar_lea.vmem [#allocation14], %s514
        %s516 = smul.u32 8, %s36
        %s517 = smul.u32 8, %s36
        %s518 = smul.u32 8, %s36
        %v519 = vld [vmem:[%s415] sm:$0xff]
        %v520 = vld [vmem:[%s433] sm:$0xff]
        %v521 = vld [vmem:[%s433 + $0x8] sm:$0xff]
        %v522 = vld [vmem:[%s433 + $0x10] sm:$0xff]
        %v523 = vld [vmem:[%s433 + $0x18] sm:$0xff]
        %v524 = vld [vmem:[%s433 + $0x20] sm:$0xff]
        %v525 = vld [vmem:[%s433 + $0x28] sm:$0xff]
        %v526 = vld [vmem:[%s433 + $0x30] sm:$0xff]
        %v527 = vld [vmem:[%s433 + $0x38] sm:$0xff]
        %v528 = vld [vmem:[%s433 + $0x40] sm:$0xff]
        %v529 = vld [vmem:[%s433 + $0x48] sm:$0xff]
        %v530 = vld [vmem:[%s433 + $0x50] sm:$0xff]
        %v531 = vld [vmem:[%s433 + $0x58] sm:$0xff]
        %v532 = vld [vmem:[%s433 + $0x60] sm:$0xff]
        %v533 = vld [vmem:[%s433 + $0x68] sm:$0xff]
        %v534 = vld [vmem:[%s433 + $0x70] sm:$0xff]
        %v535 = vld [vmem:[%s433 + $0x78] sm:$0xff]
        %v536 = vld [vmem:[%s451] sm:$0xff]
        %v537 = vld [vmem:[%s442] sm:$0xff]
        %v538 = vld [vmem:[%s5] sm:$0x1]
        %v539 = vld [vmem:[%s6] sm:$0x1]
        %v541 = vcombine.high %v519, %v519
        %v543 = vunpack.c.l.s4 1966171168
        %v544 = vunpack.c.0.s8 %v543
        %v545 = vlaneseq
        %v546 = vshrl.u32 %v545, 7
        %v547 = vsub.s32 %v544, %v546
        %v548 = vrot.slane %v519, %v547
        %v550 = vunpack.c.l.s4 1966171168
        %v551 = vunpack.c.0.s8 %v550
        %v552 = vlaneseq
        %v553 = vshrl.u32 %v552, 7
        %v554 = vsub.s32 %v551, %v553
        %v555 = vrot.slane %v541, %v554
        %v556 = vcombine.high %v548, %v548
        %v557 = vcombine.high %v555, %v555
        %v559 = vunpack.c.l.s4 1966171168
        %v560 = vunpack.c.0.s8 %v559
        %v561 = vlaneseq
        %v562 = vshrl.u32 %v561, 7
        %v563 = vsub.s32 %v560, %v562
        %v564 = vrot.slane %v548, %v563
        %v566 = vunpack.c.l.s4 1966171168
        %v567 = vunpack.c.0.s8 %v566
        %v568 = vlaneseq
        %v569 = vshrl.u32 %v568, 7
        %v570 = vsub.s32 %v567, %v569
        %v571 = vrot.slane %v555, %v570
        %v573 = vunpack.c.l.s4 1966171168
        %v574 = vunpack.c.0.s8 %v573
        %v575 = vlaneseq
        %v576 = vshrl.u32 %v575, 7
        %v577 = vsub.s32 %v574, %v576
        %v578 = vrot.slane %v556, %v577
        %v580 = vunpack.c.l.s4 1966171168
        %v581 = vunpack.c.0.s8 %v580
        %v582 = vlaneseq
        %v583 = vshrl.u32 %v582, 7
        %v584 = vsub.s32 %v581, %v583
        %v585 = vrot.slane %v557, %v584
        %v586 = vcombine.high %v564, %v564
        %v587 = vcombine.high %v571, %v571
        %v588 = vcombine.high %v578, %v578
        %v589 = vcombine.high %v585, %v585
        %v590 = vlaneseq
        %v591 = vshrl.u32 %v590, 7
        %v592 = vsub.s32 0, %v591
        %v593 = vrot.slane %v564, %v592
        %v594 = vlaneseq
        %v595 = vshrl.u32 %v594, 7
        %v596 = vsub.s32 0, %v595
        %v597 = vrot.slane %v578, %v596
        %v598 = vlaneseq
        %v599 = vshrl.u32 %v598, 7
        %v600 = vsub.s32 0, %v599
        %v601 = vrot.slane %v586, %v600
        %v602 = vlaneseq
        %v603 = vshrl.u32 %v602, 7
        %v604 = vsub.s32 0, %v603
        %v605 = vrot.slane %v588, %v604
        %v606 = vlaneseq
        %v607 = vshrl.u32 %v606, 7
        %v608 = vsub.s32 0, %v607
        %v609 = vrot.slane %v571, %v608
        %v610 = vlaneseq
        %v611 = vshrl.u32 %v610, 7
        %v612 = vsub.s32 0, %v611
        %v613 = vrot.slane %v585, %v612
        %v614 = vlaneseq
        %v615 = vshrl.u32 %v614, 7
        %v616 = vsub.s32 0, %v615
        %v617 = vrot.slane %v587, %v616
        %v618 = vlaneseq
        %v619 = vshrl.u32 %v618, 7
        %v620 = vsub.s32 0, %v619
        %v621 = vrot.slane %v589, %v620
        %v630 = vadd.f32 %v520, %v593
        %v631 = vadd.f32 %v521, %v593
        %v632 = vadd.f32 %v522, %v597
        %v633 = vadd.f32 %v523, %v597
        %v634 = vadd.f32 %v524, %v601
        %v635 = vadd.f32 %v525, %v601
        %v636 = vadd.f32 %v526, %v605
        %v637 = vadd.f32 %v527, %v605
        %v638 = vadd.f32 %v528, %v609
        %v639 = vadd.f32 %v529, %v609
        %v640 = vadd.f32 %v530, %v613
        %v641 = vadd.f32 %v531, %v613
        %v642 = vadd.f32 %v532, %v617
        %v643 = vadd.f32 %v533, %v617
        %v644 = vadd.f32 %v534, %v621
        %v645 = vadd.f32 %v535, %v621
        %v646 = vlaneseq
        %v647 = vshrl.u32 %v646, 7
        %v648 = vsub.s32 0, %v647
        %v649 = vrot.slane %v536, %v648
        %651 = vbcast.lane.b32.xlu0 %v649, 256
        %v652 = vpop.permute.xlu0 %651
        %s654 = sor.u32 256, 8
        %655 = vbcast.lane.b32.xlu0 %v649, %s654
        %v656 = vpop.permute.xlu0 %655
        %v657 = vlaneseq
        %v658 = vshrl.u32 %v657, 7
        %v659 = vsub.s32 1, %v658
        %v660 = vrot.slane %v536, %v659
        %662 = vbcast.lane.b32.xlu0 %v660, 256
        %v663 = vpop.permute.xlu0 %662
        %s665 = sor.u32 256, 8
        %666 = vbcast.lane.b32.xlu0 %v660, %s665
        %v667 = vpop.permute.xlu0 %666
        %v668 = vlaneseq
        %v669 = vshrl.u32 %v668, 7
        %v670 = vsub.s32 2, %v669
        %v671 = vrot.slane %v536, %v670
        %673 = vbcast.lane.b32.xlu0 %v671, 256
        %v674 = vpop.permute.xlu0 %673
        %s676 = sor.u32 256, 8
        %677 = vbcast.lane.b32.xlu0 %v671, %s676
        %v678 = vpop.permute.xlu0 %677
        %v679 = vlaneseq
        %v680 = vshrl.u32 %v679, 7
        %v681 = vsub.s32 3, %v680
        %v682 = vrot.slane %v536, %v681
        %684 = vbcast.lane.b32.xlu0 %v682, 256
        %v685 = vpop.permute.xlu0 %684
        %s687 = sor.u32 256, 8
        %688 = vbcast.lane.b32.xlu0 %v682, %s687
        %v689 = vpop.permute.xlu0 %688
        %v690 = vlaneseq
        %v691 = vshrl.u32 %v690, 7
        %v692 = vsub.s32 4, %v691
        %v693 = vrot.slane %v536, %v692
        %695 = vbcast.lane.b32.xlu0 %v693, 256
        %v696 = vpop.permute.xlu0 %695
        %s698 = sor.u32 256, 8
        %699 = vbcast.lane.b32.xlu0 %v693, %s698
        %v700 = vpop.permute.xlu0 %699
        %v701 = vlaneseq
        %v702 = vshrl.u32 %v701, 7
        %v703 = vsub.s32 5, %v702
        %v704 = vrot.slane %v536, %v703
        %706 = vbcast.lane.b32.xlu0 %v704, 256
        %v707 = vpop.permute.xlu0 %706
        %s709 = sor.u32 256, 8
        %710 = vbcast.lane.b32.xlu0 %v704, %s709
        %v711 = vpop.permute.xlu0 %710
        %v712 = vlaneseq
        %v713 = vshrl.u32 %v712, 7
        %v714 = vsub.s32 6, %v713
        %v715 = vrot.slane %v536, %v714
        %717 = vbcast.lane.b32.xlu0 %v715, 256
        %v718 = vpop.permute.xlu0 %717
        %s720 = sor.u32 256, 8
        %721 = vbcast.lane.b32.xlu0 %v715, %s720
        %v722 = vpop.permute.xlu0 %721
        %v723 = vlaneseq
        %v724 = vshrl.u32 %v723, 7
        %v725 = vsub.s32 7, %v724
        %v726 = vrot.slane %v536, %v725
        %728 = vbcast.lane.b32.xlu0 %v726, 256
        %v729 = vpop.permute.xlu0 %728
        %s731 = sor.u32 256, 8
        %732 = vbcast.lane.b32.xlu0 %v726, %s731
        %v733 = vpop.permute.xlu0 %732
        %v735 = vlaneseq
        %v736 = vshrl.u32 %v735, 7
        %v737 = vsub.s32 0, %v736
        %v738 = vrot.slane %v538, %v737
        %v740 = vmul.f32 %v652, %v738
        %v741 = vmul.f32 %v656, %v738
        %v742 = vmul.f32 %v663, %v738
        %v743 = vmul.f32 %v667, %v738
        %v744 = vmul.f32 %v674, %v738
        %v745 = vmul.f32 %v678, %v738
        %v746 = vmul.f32 %v685, %v738
        %v747 = vmul.f32 %v689, %v738
        %v748 = vmul.f32 %v696, %v738
        %v749 = vmul.f32 %v700, %v738
        %v750 = vmul.f32 %v707, %v738
        %v751 = vmul.f32 %v711, %v738
        %v752 = vmul.f32 %v718, %v738
        %v753 = vmul.f32 %v722, %v738
        %v754 = vmul.f32 %v729, %v738
        %v755 = vmul.f32 %v733, %v738
        %v756 = vadd.f32 %v630, %v740
        %v757 = vadd.f32 %v631, %v741
        %v758 = vadd.f32 %v632, %v742
        %v759 = vadd.f32 %v633, %v743
        %v760 = vadd.f32 %v634, %v744
        %v761 = vadd.f32 %v635, %v745
        %v762 = vadd.f32 %v636, %v746
        %v763 = vadd.f32 %v637, %v747
        %v764 = vadd.f32 %v638, %v748
        %v765 = vadd.f32 %v639, %v749
        %v766 = vadd.f32 %v640, %v750
        %v767 = vadd.f32 %v641, %v751
        %v768 = vadd.f32 %v642, %v752
        %v769 = vadd.f32 %v643, %v753
        %v770 = vadd.f32 %v644, %v754
        %v771 = vadd.f32 %v645, %v755
        %v772 = vtanh.pop %v756
        %v773 = vtanh.pop %v757
        %v774 = vtanh.pop %v758
        %v775 = vtanh.pop %v759
        %v776 = vtanh.pop %v760
        %v777 = vtanh.pop %v761
        %v778 = vtanh.pop %v762
        %v779 = vtanh.pop %v763
        %v780 = vtanh.pop %v764
        %v781 = vtanh.pop %v765
        %v782 = vtanh.pop %v766
        %v783 = vtanh.pop %v767
        %v784 = vtanh.pop %v768
        %v785 = vtanh.pop %v769
        %v786 = vtanh.pop %v770
        %v787 = vtanh.pop %v771
        %v789 = vlaneseq
        %v790 = vshrl.u32 %v789, 7
        %v791 = vsub.s32 0, %v790
        %v792 = vrot.slane %v539, %v791
        %v794 = vmul.f32 %v772, %v792
        %v795 = vmul.f32 %v773, %v792
        %v796 = vmul.f32 %v774, %v792
        %v797 = vmul.f32 %v775, %v792
        %v798 = vmul.f32 %v776, %v792
        %v799 = vmul.f32 %v777, %v792
        %v800 = vmul.f32 %v778, %v792
        %v801 = vmul.f32 %v779, %v792
        %v802 = vmul.f32 %v780, %v792
        %v803 = vmul.f32 %v781, %v792
        %v804 = vmul.f32 %v782, %v792
        %v805 = vmul.f32 %v783, %v792
        %v806 = vmul.f32 %v784, %v792
        %v807 = vmul.f32 %v785, %v792
        %v808 = vmul.f32 %v786, %v792
        %v809 = vmul.f32 %v787, %v792
        %810 = vadd.xlane.f32.xlu0 %v794
        %v811 = vpop.xlane.xlu0 %810
        %812 = vadd.xlane.f32.xlu0 %v795
        %v813 = vpop.xlane.xlu0 %812
        %814 = vadd.xlane.f32.xlu0 %v796
        %v815 = vpop.xlane.xlu0 %814
        %816 = vadd.xlane.f32.xlu0 %v797
        %v817 = vpop.xlane.xlu0 %816
        %818 = vadd.xlane.f32.xlu0 %v798
        %v819 = vpop.xlane.xlu0 %818
        %820 = vadd.xlane.f32.xlu0 %v799
        %v821 = vpop.xlane.xlu0 %820
        %822 = vadd.xlane.f32.xlu0 %v800
        %v823 = vpop.xlane.xlu0 %822
        %824 = vadd.xlane.f32.xlu0 %v801
        %v825 = vpop.xlane.xlu0 %824
        %826 = vadd.xlane.f32.xlu0 %v802
        %v827 = vpop.xlane.xlu0 %826
        %828 = vadd.xlane.f32.xlu0 %v803
        %v829 = vpop.xlane.xlu0 %828
        %830 = vadd.xlane.f32.xlu0 %v804
        %v831 = vpop.xlane.xlu0 %830
        %832 = vadd.xlane.f32.xlu0 %v805
        %v833 = vpop.xlane.xlu0 %832
        %834 = vadd.xlane.f32.xlu0 %v806
        %v835 = vpop.xlane.xlu0 %834
        %836 = vadd.xlane.f32.xlu0 %v807
        %v837 = vpop.xlane.xlu0 %836
        %838 = vadd.xlane.f32.xlu0 %v808
        %v839 = vpop.xlane.xlu0 %838
        %840 = vadd.xlane.f32.xlu0 %v809
        %v841 = vpop.xlane.xlu0 %840
        %v858 = vlaneseq
        %v859 = vand.u32 %v858, 127
        %v860 = vlaneseq
        %v861 = vshrl.u32 %v860, 7
        %v862 = vsub.s32 %v859, %v861
        %v863 = vrot.slane %v811, %v862
        %v864 = vadd.s32 %v859, 4294967288
        %v865 = vlaneseq
        %v866 = vshrl.u32 %v865, 7
        %v867 = vsub.s32 %v864, %v866
        %v868 = vrot.slane %v813, %v867
        %vm869 = vcmask 130112
        %v870 = vsel %vm869, %v868, %v863
        %v871 = vlaneseq
        %v872 = vshrl.u32 %v871, 7
        %v873 = vsub.s32 %v859, %v872
        %v874 = vrot.slane %v815, %v873
        %v875 = vlaneseq
        %v876 = vshrl.u32 %v875, 7
        %v877 = vsub.s32 %v864, %v876
        %v878 = vrot.slane %v817, %v877
        %v879 = vsel %vm869, %v878, %v874
        %v880 = vlaneseq
        %v881 = vshrl.u32 %v880, 7
        %v882 = vsub.s32 %v859, %v881
        %v883 = vrot.slane %v819, %v882
        %v884 = vlaneseq
        %v885 = vshrl.u32 %v884, 7
        %v886 = vsub.s32 %v864, %v885
        %v887 = vrot.slane %v821, %v886
        %v888 = vsel %vm869, %v887, %v883
        %v889 = vlaneseq
        %v890 = vshrl.u32 %v889, 7
        %v891 = vsub.s32 %v859, %v890
        %v892 = vrot.slane %v823, %v891
        %v893 = vlaneseq
        %v894 = vshrl.u32 %v893, 7
        %v895 = vsub.s32 %v864, %v894
        %v896 = vrot.slane %v825, %v895
        %v897 = vsel %vm869, %v896, %v892
        %v898 = vlaneseq
        %v899 = vshrl.u32 %v898, 7
        %v900 = vsub.s32 %v859, %v899
        %v901 = vrot.slane %v827, %v900
        %v902 = vlaneseq
        %v903 = vshrl.u32 %v902, 7
        %v904 = vsub.s32 %v864, %v903
        %v905 = vrot.slane %v829, %v904
        %v906 = vsel %vm869, %v905, %v901
        %v907 = vlaneseq
        %v908 = vshrl.u32 %v907, 7
        %v909 = vsub.s32 %v859, %v908
        %v910 = vrot.slane %v831, %v909
        %v911 = vlaneseq
        %v912 = vshrl.u32 %v911, 7
        %v913 = vsub.s32 %v864, %v912
        %v914 = vrot.slane %v833, %v913
        %v915 = vsel %vm869, %v914, %v910
        %v916 = vlaneseq
        %v917 = vshrl.u32 %v916, 7
        %v918 = vsub.s32 %v859, %v917
        %v919 = vrot.slane %v835, %v918
        %v920 = vlaneseq
        %v921 = vshrl.u32 %v920, 7
        %v922 = vsub.s32 %v864, %v921
        %v923 = vrot.slane %v837, %v922
        %v924 = vsel %vm869, %v923, %v919
        %v925 = vlaneseq
        %v926 = vshrl.u32 %v925, 7
        %v927 = vsub.s32 %v859, %v926
        %v928 = vrot.slane %v839, %v927
        %v929 = vlaneseq
        %v930 = vshrl.u32 %v929, 7
        %v931 = vsub.s32 %v864, %v930
        %v932 = vrot.slane %v841, %v931
        %v933 = vsel %vm869, %v932, %v928
        %vm934 = vcmask 1041409
        %v935 = vsel %vm934, %v879, %v870
        %vm936 = vcmask 1042434
        %v937 = vsel %vm936, %v888, %v935
        %vm938 = vcmask 1043459
        %v939 = vsel %vm938, %v897, %v937
        %vm940 = vcmask 1044484
        %v941 = vsel %vm940, %v906, %v939
        %vm942 = vcmask 1045509
        %v943 = vsel %vm942, %v915, %v941
        %vm944 = vcmask 1046534
        %v945 = vsel %vm944, %v924, %v943
        %vm946 = vcmask 1047559
        %v947 = vsel %vm946, %v933, %v945
        %vm949 = vcmask 130048
        %v950 = vsel %vm949, %v947, -inf
        %951 = vmax.xlane.f32.xlu0 %v950
        %v952 = vpop.xlane.xlu0 %951
        %v954 = vlaneseq
        %v955 = vshrl.u32 %v954, 7
        %v956 = vsub.s32 0, %v955
        %v957 = vrot.slane %v952, %v956
        %v958 = vlaneseq
        %v959 = vshrl.u32 %v958, 7
        %v960 = vsub.s32 1, %v959
        %v961 = vrot.slane %v952, %v960
        %v962 = vlaneseq
        %v963 = vshrl.u32 %v962, 7
        %v964 = vsub.s32 2, %v963
        %v965 = vrot.slane %v952, %v964
        %v966 = vlaneseq
        %v967 = vshrl.u32 %v966, 7
        %v968 = vsub.s32 3, %v967
        %v969 = vrot.slane %v952, %v968
        %v970 = vlaneseq
        %v971 = vshrl.u32 %v970, 7
        %v972 = vsub.s32 4, %v971
        %v973 = vrot.slane %v952, %v972
        %v974 = vlaneseq
        %v975 = vshrl.u32 %v974, 7
        %v976 = vsub.s32 5, %v975
        %v977 = vrot.slane %v952, %v976
        %v978 = vlaneseq
        %v979 = vshrl.u32 %v978, 7
        %v980 = vsub.s32 6, %v979
        %v981 = vrot.slane %v952, %v980
        %v982 = vlaneseq
        %v983 = vshrl.u32 %v982, 7
        %v984 = vsub.s32 7, %v983
        %v985 = vrot.slane %v952, %v984
        %v994 = vsub.f32 %v811, %v957
        %v995 = vsub.f32 %v813, %v957
        %v996 = vsub.f32 %v815, %v961
        %v997 = vsub.f32 %v817, %v961
        %v998 = vsub.f32 %v819, %v965
        %v999 = vsub.f32 %v821, %v965
        %v1000 = vsub.f32 %v823, %v969
        %v1001 = vsub.f32 %v825, %v969
        %v1002 = vsub.f32 %v827, %v973
        %v1003 = vsub.f32 %v829, %v973
        %v1004 = vsub.f32 %v831, %v977
        %v1005 = vsub.f32 %v833, %v977
        %v1006 = vsub.f32 %v835, %v981
        %v1007 = vsub.f32 %v837, %v981
        %v1008 = vsub.f32 %v839, %v985
        %v1009 = vsub.f32 %v841, %v985
        %v1010 = vmul.f32 %v994, 1.442695
        %v1011 = vpow.pop %v1010
        %v1012 = vmul.f32 %v995, 1.442695
        %v1013 = vpow.pop %v1012
        %v1014 = vmul.f32 %v996, 1.442695
        %v1015 = vpow.pop %v1014
        %v1016 = vmul.f32 %v997, 1.442695
        %v1017 = vpow.pop %v1016
        %v1018 = vmul.f32 %v998, 1.442695
        %v1019 = vpow.pop %v1018
        %v1020 = vmul.f32 %v999, 1.442695
        %v1021 = vpow.pop %v1020
        %v1022 = vmul.f32 %v1000, 1.442695
        %v1023 = vpow.pop %v1022
        %v1024 = vmul.f32 %v1001, 1.442695
        %v1025 = vpow.pop %v1024
        %v1026 = vmul.f32 %v1002, 1.442695
        %v1027 = vpow.pop %v1026
        %v1028 = vmul.f32 %v1003, 1.442695
        %v1029 = vpow.pop %v1028
        %v1030 = vmul.f32 %v1004, 1.442695
        %v1031 = vpow.pop %v1030
        %v1032 = vmul.f32 %v1005, 1.442695
        %v1033 = vpow.pop %v1032
        %v1034 = vmul.f32 %v1006, 1.442695
        %v1035 = vpow.pop %v1034
        %v1036 = vmul.f32 %v1007, 1.442695
        %v1037 = vpow.pop %v1036
        %v1038 = vmul.f32 %v1008, 1.442695
        %v1039 = vpow.pop %v1038
        %v1040 = vmul.f32 %v1009, 1.442695
        %v1041 = vpow.pop %v1040
        %v1043 = vlaneseq
        %v1044 = vshrl.u32 %v1043, 7
        %v1045 = vsub.s32 0, %v1044
        %v1046 = vrot.slane %v537, %v1045
        %1048 = vbcast.lane.b32.xlu0 %v1046, 256
        %v1049 = vpop.permute.xlu0 %1048
        %s1051 = sor.u32 256, 8
        %1052 = vbcast.lane.b32.xlu0 %v1046, %s1051
        %v1053 = vpop.permute.xlu0 %1052
        %v1054 = vlaneseq
        %v1055 = vshrl.u32 %v1054, 7
        %v1056 = vsub.s32 1, %v1055
        %v1057 = vrot.slane %v537, %v1056
        %1059 = vbcast.lane.b32.xlu0 %v1057, 256
        %v1060 = vpop.permute.xlu0 %1059
        %s1062 = sor.u32 256, 8
        %1063 = vbcast.lane.b32.xlu0 %v1057, %s1062
        %v1064 = vpop.permute.xlu0 %1063
        %v1065 = vlaneseq
        %v1066 = vshrl.u32 %v1065, 7
        %v1067 = vsub.s32 2, %v1066
        %v1068 = vrot.slane %v537, %v1067
        %1070 = vbcast.lane.b32.xlu0 %v1068, 256
        %v1071 = vpop.permute.xlu0 %1070
        %s1073 = sor.u32 256, 8
        %1074 = vbcast.lane.b32.xlu0 %v1068, %s1073
        %v1075 = vpop.permute.xlu0 %1074
        %v1076 = vlaneseq
        %v1077 = vshrl.u32 %v1076, 7
        %v1078 = vsub.s32 3, %v1077
        %v1079 = vrot.slane %v537, %v1078
        %1081 = vbcast.lane.b32.xlu0 %v1079, 256
        %v1082 = vpop.permute.xlu0 %1081
        %s1084 = sor.u32 256, 8
        %1085 = vbcast.lane.b32.xlu0 %v1079, %s1084
        %v1086 = vpop.permute.xlu0 %1085
        %v1087 = vlaneseq
        %v1088 = vshrl.u32 %v1087, 7
        %v1089 = vsub.s32 4, %v1088
        %v1090 = vrot.slane %v537, %v1089
        %1092 = vbcast.lane.b32.xlu0 %v1090, 256
        %v1093 = vpop.permute.xlu0 %1092
        %s1095 = sor.u32 256, 8
        %1096 = vbcast.lane.b32.xlu0 %v1090, %s1095
        %v1097 = vpop.permute.xlu0 %1096
        %v1098 = vlaneseq
        %v1099 = vshrl.u32 %v1098, 7
        %v1100 = vsub.s32 5, %v1099
        %v1101 = vrot.slane %v537, %v1100
        %1103 = vbcast.lane.b32.xlu0 %v1101, 256
        %v1104 = vpop.permute.xlu0 %1103
        %s1106 = sor.u32 256, 8
        %1107 = vbcast.lane.b32.xlu0 %v1101, %s1106
        %v1108 = vpop.permute.xlu0 %1107
        %v1109 = vlaneseq
        %v1110 = vshrl.u32 %v1109, 7
        %v1111 = vsub.s32 6, %v1110
        %v1112 = vrot.slane %v537, %v1111
        %1114 = vbcast.lane.b32.xlu0 %v1112, 256
        %v1115 = vpop.permute.xlu0 %1114
        %s1117 = sor.u32 256, 8
        %1118 = vbcast.lane.b32.xlu0 %v1112, %s1117
        %v1119 = vpop.permute.xlu0 %1118
        %v1120 = vlaneseq
        %v1121 = vshrl.u32 %v1120, 7
        %v1122 = vsub.s32 7, %v1121
        %v1123 = vrot.slane %v537, %v1122
        %1125 = vbcast.lane.b32.xlu0 %v1123, 256
        %v1126 = vpop.permute.xlu0 %1125
        %s1128 = sor.u32 256, 8
        %1129 = vbcast.lane.b32.xlu0 %v1123, %s1128
        %v1130 = vpop.permute.xlu0 %1129
        %v1147 = vmul.f32 %v1011, %v1049
        %v1148 = vmul.f32 %v1013, %v1053
        %v1149 = vmul.f32 %v1015, %v1060
        %v1150 = vmul.f32 %v1017, %v1064
        %v1151 = vmul.f32 %v1019, %v1071
        %v1152 = vmul.f32 %v1021, %v1075
        %v1153 = vmul.f32 %v1023, %v1082
        %v1154 = vmul.f32 %v1025, %v1086
        %v1155 = vmul.f32 %v1027, %v1093
        %v1156 = vmul.f32 %v1029, %v1097
        %v1157 = vmul.f32 %v1031, %v1104
        %v1158 = vmul.f32 %v1033, %v1108
        %v1159 = vmul.f32 %v1035, %v1115
        %v1160 = vmul.f32 %v1037, %v1119
        %v1161 = vmul.f32 %v1039, %v1126
        %v1162 = vmul.f32 %v1041, %v1130
        %1179 = vset.pattern.permute.xlu0 0
        %1180 = vperm.xlu0 %1179, %v1147
        %v1181 = vpop.permute.xlu0 %1180
        %1182 = vset.pattern.permute.xlu0 0
        %1183 = vperm.xlu0 %1182, %v1148
        %v1184 = vpop.permute.xlu0 %1183
        %1185 = vset.pattern.permute.xlu0 0
        %1186 = vperm.xlu0 %1185, %v1149
        %v1187 = vpop.permute.xlu0 %1186
        %1188 = vset.pattern.permute.xlu0 0
        %1189 = vperm.xlu0 %1188, %v1150
        %v1190 = vpop.permute.xlu0 %1189
        %1191 = vset.pattern.permute.xlu0 0
        %1192 = vperm.xlu0 %1191, %v1151
        %v1193 = vpop.permute.xlu0 %1192
        %1194 = vset.pattern.permute.xlu0 0
        %1195 = vperm.xlu0 %1194, %v1152
        %v1196 = vpop.permute.xlu0 %1195
        %1197 = vset.pattern.permute.xlu0 0
        %1198 = vperm.xlu0 %1197, %v1153
        %v1199 = vpop.permute.xlu0 %1198
        %1200 = vset.pattern.permute.xlu0 0
        %1201 = vperm.xlu0 %1200, %v1154
        %v1202 = vpop.permute.xlu0 %1201
        %1203 = vset.pattern.permute.xlu0 0
        %1204 = vperm.xlu0 %1203, %v1155
        %v1205 = vpop.permute.xlu0 %1204
        %1206 = vset.pattern.permute.xlu0 0
        %1207 = vperm.xlu0 %1206, %v1156
        %v1208 = vpop.permute.xlu0 %1207
        %1209 = vset.pattern.permute.xlu0 0
        %1210 = vperm.xlu0 %1209, %v1157
        %v1211 = vpop.permute.xlu0 %1210
        %1212 = vset.pattern.permute.xlu0 0
        %1213 = vperm.xlu0 %1212, %v1158
        %v1214 = vpop.permute.xlu0 %1213
        %1215 = vset.pattern.permute.xlu0 0
        %1216 = vperm.xlu0 %1215, %v1159
        %v1217 = vpop.permute.xlu0 %1216
        %1218 = vset.pattern.permute.xlu0 0
        %1219 = vperm.xlu0 %1218, %v1160
        %v1220 = vpop.permute.xlu0 %1219
        %1221 = vset.pattern.permute.xlu0 0
        %1222 = vperm.xlu0 %1221, %v1161
        %v1223 = vpop.permute.xlu0 %1222
        %1224 = vset.pattern.permute.xlu0 0
        %1225 = vperm.xlu0 %1224, %v1162
        %v1226 = vpop.permute.xlu0 %1225
        %v1227 = vlaneseq
        %v1228 = vshrl.u32 %v1227, 7
        %v1229 = vsub.s32 %v859, %v1228
        %v1230 = vrot.slane %v1181, %v1229
        %v1231 = vlaneseq
        %v1232 = vshrl.u32 %v1231, 7
        %v1233 = vsub.s32 %v864, %v1232
        %v1234 = vrot.slane %v1184, %v1233
        %v1235 = vsel %vm869, %v1234, %v1230
        %v1236 = vlaneseq
        %v1237 = vshrl.u32 %v1236, 7
        %v1238 = vsub.s32 %v859, %v1237
        %v1239 = vrot.slane %v1187, %v1238
        %v1240 = vlaneseq
        %v1241 = vshrl.u32 %v1240, 7
        %v1242 = vsub.s32 %v864, %v1241
        %v1243 = vrot.slane %v1190, %v1242
        %v1244 = vsel %vm869, %v1243, %v1239
        %v1245 = vlaneseq
        %v1246 = vshrl.u32 %v1245, 7
        %v1247 = vsub.s32 %v859, %v1246
        %v1248 = vrot.slane %v1193, %v1247
        %v1249 = vlaneseq
        %v1250 = vshrl.u32 %v1249, 7
        %v1251 = vsub.s32 %v864, %v1250
        %v1252 = vrot.slane %v1196, %v1251
        %v1253 = vsel %vm869, %v1252, %v1248
        %v1254 = vlaneseq
        %v1255 = vshrl.u32 %v1254, 7
        %v1256 = vsub.s32 %v859, %v1255
        %v1257 = vrot.slane %v1199, %v1256
        %v1258 = vlaneseq
        %v1259 = vshrl.u32 %v1258, 7
        %v1260 = vsub.s32 %v864, %v1259
        %v1261 = vrot.slane %v1202, %v1260
        %v1262 = vsel %vm869, %v1261, %v1257
        %v1263 = vlaneseq
        %v1264 = vshrl.u32 %v1263, 7
        %v1265 = vsub.s32 %v859, %v1264
        %v1266 = vrot.slane %v1205, %v1265
        %v1267 = vlaneseq
        %v1268 = vshrl.u32 %v1267, 7
        %v1269 = vsub.s32 %v864, %v1268
        %v1270 = vrot.slane %v1208, %v1269
        %v1271 = vsel %vm869, %v1270, %v1266
        %v1272 = vlaneseq
        %v1273 = vshrl.u32 %v1272, 7
        %v1274 = vsub.s32 %v859, %v1273
        %v1275 = vrot.slane %v1211, %v1274
        %v1276 = vlaneseq
        %v1277 = vshrl.u32 %v1276, 7
        %v1278 = vsub.s32 %v864, %v1277
        %v1279 = vrot.slane %v1214, %v1278
        %v1280 = vsel %vm869, %v1279, %v1275
        %v1281 = vlaneseq
        %v1282 = vshrl.u32 %v1281, 7
        %v1283 = vsub.s32 %v859, %v1282
        %v1284 = vrot.slane %v1217, %v1283
        %v1285 = vlaneseq
        %v1286 = vshrl.u32 %v1285, 7
        %v1287 = vsub.s32 %v864, %v1286
        %v1288 = vrot.slane %v1220, %v1287
        %v1289 = vsel %vm869, %v1288, %v1284
        %v1290 = vlaneseq
        %v1291 = vshrl.u32 %v1290, 7
        %v1292 = vsub.s32 %v859, %v1291
        %v1293 = vrot.slane %v1223, %v1292
        %v1294 = vlaneseq
        %v1295 = vshrl.u32 %v1294, 7
        %v1296 = vsub.s32 %v864, %v1295
        %v1297 = vrot.slane %v1226, %v1296
        %v1298 = vsel %vm869, %v1297, %v1293
        %v1299 = vsel %vm934, %v1244, %v1235
        %v1300 = vsel %vm936, %v1253, %v1299
        %v1301 = vsel %vm938, %v1262, %v1300
        %v1302 = vsel %vm940, %v1271, %v1301
        %v1303 = vsel %vm942, %v1280, %v1302
        %v1304 = vsel %vm944, %v1289, %v1303
        %v1305 = vsel %vm946, %v1298, %v1304
        %v1307 = vsel %vm949, %v1305, 0.0
        %1308 = vadd.xlane.f32.xlu0 %v1307
        %v1309 = vpop.xlane.xlu0 %1308
        %v1310 = vrcp.pop %v1309
        %v1312 = vlaneseq
        %v1313 = vshrl.u32 %v1312, 7
        %v1314 = vsub.s32 0, %v1313
        %v1315 = vrot.slane %v1310, %v1314
        %v1316 = vlaneseq
        %v1317 = vshrl.u32 %v1316, 7
        %v1318 = vsub.s32 1, %v1317
        %v1319 = vrot.slane %v1310, %v1318
        %v1320 = vlaneseq
        %v1321 = vshrl.u32 %v1320, 7
        %v1322 = vsub.s32 2, %v1321
        %v1323 = vrot.slane %v1310, %v1322
        %v1324 = vlaneseq
        %v1325 = vshrl.u32 %v1324, 7
        %v1326 = vsub.s32 3, %v1325
        %v1327 = vrot.slane %v1310, %v1326
        %v1328 = vlaneseq
        %v1329 = vshrl.u32 %v1328, 7
        %v1330 = vsub.s32 4, %v1329
        %v1331 = vrot.slane %v1310, %v1330
        %v1332 = vlaneseq
        %v1333 = vshrl.u32 %v1332, 7
        %v1334 = vsub.s32 5, %v1333
        %v1335 = vrot.slane %v1310, %v1334
        %v1336 = vlaneseq
        %v1337 = vshrl.u32 %v1336, 7
        %v1338 = vsub.s32 6, %v1337
        %v1339 = vrot.slane %v1310, %v1338
        %v1340 = vlaneseq
        %v1341 = vshrl.u32 %v1340, 7
        %v1342 = vsub.s32 7, %v1341
        %v1343 = vrot.slane %v1310, %v1342
        %v1352 = vmul.f32 %v1147, %v1315
        %v1353 = vmul.f32 %v1148, %v1315
        %v1354 = vmul.f32 %v1149, %v1319
        %v1355 = vmul.f32 %v1150, %v1319
        %v1356 = vmul.f32 %v1151, %v1323
        %v1357 = vmul.f32 %v1152, %v1323
        %v1358 = vmul.f32 %v1153, %v1327
        %v1359 = vmul.f32 %v1154, %v1327
        %v1360 = vmul.f32 %v1155, %v1331
        %v1361 = vmul.f32 %v1156, %v1331
        %v1362 = vmul.f32 %v1157, %v1335
        %v1363 = vmul.f32 %v1158, %v1335
        %v1364 = vmul.f32 %v1159, %v1339
        %v1365 = vmul.f32 %v1160, %v1339
        %v1366 = vmul.f32 %v1161, %v1343
        %v1367 = vmul.f32 %v1162, %v1343
        %v1368 = vld [vmem:[%s424] sm:$0xff]
        %v1369 = vld [vmem:[%s424 + $0x8] sm:$0xff]
        %v1370 = vld [vmem:[%s424 + $0x10] sm:$0xff]
        %v1371 = vld [vmem:[%s424 + $0x18] sm:$0xff]
        %v1372 = vld [vmem:[%s424 + $0x20] sm:$0xff]
        %v1373 = vld [vmem:[%s424 + $0x28] sm:$0xff]
        %v1374 = vld [vmem:[%s424 + $0x30] sm:$0xff]
        %v1375 = vld [vmem:[%s424 + $0x38] sm:$0xff]
        %v1376 = vld [vmem:[%s424 + $0x40] sm:$0xff]
        %v1377 = vld [vmem:[%s424 + $0x48] sm:$0xff]
        %v1378 = vld [vmem:[%s424 + $0x50] sm:$0xff]
        %v1379 = vld [vmem:[%s424 + $0x58] sm:$0xff]
        %v1380 = vld [vmem:[%s424 + $0x60] sm:$0xff]
        %v1381 = vld [vmem:[%s424 + $0x68] sm:$0xff]
        %v1382 = vld [vmem:[%s424 + $0x70] sm:$0xff]
        %v1383 = vld [vmem:[%s424 + $0x78] sm:$0xff]
        %1386 = vset.pattern.permute.xlu0 0
        %1387 = vperm.xlu0 %1386, %v1352
        %v1388 = vpop.permute.xlu0 %1387
        %1389 = vset.pattern.permute.xlu0 0
        %1390 = vperm.xlu0 %1389, %v1353
        %v1391 = vpop.permute.xlu0 %1390
        %v1392 = vlaneseq
        %v1393 = vshrl.u32 %v1392, 7
        %v1394 = vsub.s32 %v859, %v1393
        %v1395 = vrot.slane %v1388, %v1394
        %v1396 = vlaneseq
        %v1397 = vshrl.u32 %v1396, 7
        %v1398 = vsub.s32 %v864, %v1397
        %v1399 = vrot.slane %v1391, %v1398
        %v1400 = vsel %vm869, %v1399, %v1395
        %v1401 = vsel %vm949, %v1400, 0
        %1403 = vmatprep.subr.mxu0 0.0
        %1404 = vmatpush1.msra.mxu0 %v1368
        %1405 = vmatprep.subr.mxu0 0.0
        %1406 = vmatpush1.msra.mxu0 %v1369
        %1407 = vmatprep.subr.mxu0 0.0
        %1408 = vmatpush1.msra.mxu0 0.0
        %1409 = vmatprep.subr.mxu0 0.0
        %1410 = vmatpush1.msra.mxu0 0.0
        %1411 = vmatprep.subr.mxu0 0.0
        %1412 = vmatpush1.msra.mxu0 0.0
        %1413 = vmatprep.subr.mxu0 0.0
        %1414 = vmatpush1.msra.mxu0 0.0
        %1415 = vmatprep.subr.mxu0 0.0
        %1416 = vmatpush1.msra.mxu0 0.0
        %1417 = vmatprep.subr.mxu0 0.0
        %1418 = vmatpush1.msra.mxu0 0.0
        %1419 = vmatprep.subr.mxu0 0.0
        %1420 = vmatpush1.msra.mxu0 0.0
        %1421 = vmatprep.subr.mxu0 0.0
        %1422 = vmatpush1.msra.mxu0 0.0
        %1423 = vmatprep.subr.mxu0 0.0
        %1424 = vmatpush1.msra.mxu0 0.0
        %1425 = vmatprep.subr.mxu0 0.0
        %1426 = vmatpush1.msra.mxu0 0.0
        %1427 = vmatprep.subr.mxu0 0.0
        %1428 = vmatpush1.msra.mxu0 0.0
        %1429 = vmatprep.subr.mxu0 0.0
        %1430 = vmatpush1.msra.mxu0 0.0
        %1431 = vmatprep.subr.mxu0 0.0
        %1432 = vmatpush1.msra.mxu0 0.0
        %1433 = vmatprep.subr.mxu0 0.0
        %1434 = vmatpush1.msra.mxu0 0.0
        %1435 = vmatprep.subr.mxu0 0.0
        %1436 = vmatpush1.msra.mxu0 0.0
        %1437 = vmatprep.subr.mxu0 0.0
        %1438 = vmatpush1.msra.mxu0 0.0
        %1439 = vmatprep.subr.mxu0 0.0
        %1440 = vmatpush1.msra.mxu0 0.0
        %1441 = vmatprep.subr.mxu0 0.0
        %1442 = vmatpush1.msra.mxu0 0.0
        %1443 = vmatprep.subr.mxu0 0.0
        %1444 = vmatpush1.msra.mxu0 0.0
        %1445 = vmatprep.subr.mxu0 0.0
        %1446 = vmatpush1.msra.mxu0 0.0
        %1447 = vmatprep.subr.mxu0 0.0
        %1448 = vmatpush1.msra.mxu0 0.0
        %1449 = vmatprep.subr.mxu0 0.0
        %1450 = vmatpush1.msra.mxu0 0.0
        %1451 = vmatprep.subr.mxu0 0.0
        %1452 = vmatpush1.msra.mxu0 0.0
        %1453 = vmatprep.subr.mxu0 0.0
        %1454 = vmatpush1.msra.mxu0 0.0
        %1455 = vmatprep.subr.mxu0 0.0
        %1456 = vmatpush1.msra.mxu0 0.0
        %1457 = vmatprep.subr.mxu0 0.0
        %1458 = vmatpush1.msra.mxu0 0.0
        %1459 = vmatprep.subr.mxu0 0.0
        %1460 = vmatpush1.msra.mxu0 0.0
        %1461 = vmatprep.subr.mxu0 0.0
        %1462 = vmatpush1.msra.mxu0 0.0
        %1463 = vmatprep.subr.mxu0 0.0
        %1464 = vmatpush1.msra.mxu0 0.0
        %1465 = vmatprep.subr.mxu0 0.0
        %1466 = vmatpush1.msra.mxu0 0.0
        %1467 = vmatprep.mubr.f32.mxu0 0.0
        %1468 = vmatmul.mubr.f32.gmra.mrb[0].mxu0 %v1401
        %v1469 = vpop.f32.mrb[0].mxu0
        %v1470 = vadd.f32 0.0, %v1469
        %v1471 = vpop.f32.mrb[0].mxu0
        %1472 = vdwg.mxu0
        %1475 = vset.pattern.permute.xlu0 0
        %1476 = vperm.xlu0 %1475, %v1354
        %v1477 = vpop.permute.xlu0 %1476
        %1478 = vset.pattern.permute.xlu0 0
        %1479 = vperm.xlu0 %1478, %v1355
        %v1480 = vpop.permute.xlu0 %1479
        %v1481 = vlaneseq
        %v1482 = vshrl.u32 %v1481, 7
        %v1483 = vsub.s32 %v859, %v1482
        %v1484 = vrot.slane %v1477, %v1483
        %v1485 = vlaneseq
        %v1486 = vshrl.u32 %v1485, 7
        %v1487 = vsub.s32 %v864, %v1486
        %v1488 = vrot.slane %v1480, %v1487
        %v1489 = vsel %vm869, %v1488, %v1484
        %v1490 = vsel %vm949, %v1489, 0
        %1492 = vmatprep.subr.mxu0 0.0
        %1493 = vmatpush1.msra.mxu0 %v1370
        %1494 = vmatprep.subr.mxu0 0.0
        %1495 = vmatpush1.msra.mxu0 %v1371
        %1496 = vmatprep.subr.mxu0 0.0
        %1497 = vmatpush1.msra.mxu0 0.0
        %1498 = vmatprep.subr.mxu0 0.0
        %1499 = vmatpush1.msra.mxu0 0.0
        %1500 = vmatprep.subr.mxu0 0.0
        %1501 = vmatpush1.msra.mxu0 0.0
        %1502 = vmatprep.subr.mxu0 0.0
        %1503 = vmatpush1.msra.mxu0 0.0
        %1504 = vmatprep.subr.mxu0 0.0
        %1505 = vmatpush1.msra.mxu0 0.0
        %1506 = vmatprep.subr.mxu0 0.0
        %1507 = vmatpush1.msra.mxu0 0.0
        %1508 = vmatprep.subr.mxu0 0.0
        %1509 = vmatpush1.msra.mxu0 0.0
        %1510 = vmatprep.subr.mxu0 0.0
        %1511 = vmatpush1.msra.mxu0 0.0
        %1512 = vmatprep.subr.mxu0 0.0
        %1513 = vmatpush1.msra.mxu0 0.0
        %1514 = vmatprep.subr.mxu0 0.0
        %1515 = vmatpush1.msra.mxu0 0.0
        %1516 = vmatprep.subr.mxu0 0.0
        %1517 = vmatpush1.msra.mxu0 0.0
        %1518 = vmatprep.subr.mxu0 0.0
        %1519 = vmatpush1.msra.mxu0 0.0
        %1520 = vmatprep.subr.mxu0 0.0
        %1521 = vmatpush1.msra.mxu0 0.0
        %1522 = vmatprep.subr.mxu0 0.0
        %1523 = vmatpush1.msra.mxu0 0.0
        %1524 = vmatprep.subr.mxu0 0.0
        %1525 = vmatpush1.msra.mxu0 0.0
        %1526 = vmatprep.subr.mxu0 0.0
        %1527 = vmatpush1.msra.mxu0 0.0
        %1528 = vmatprep.subr.mxu0 0.0
        %1529 = vmatpush1.msra.mxu0 0.0
        %1530 = vmatprep.subr.mxu0 0.0
        %1531 = vmatpush1.msra.mxu0 0.0
        %1532 = vmatprep.subr.mxu0 0.0
        %1533 = vmatpush1.msra.mxu0 0.0
        %1534 = vmatprep.subr.mxu0 0.0
        %1535 = vmatpush1.msra.mxu0 0.0
        %1536 = vmatprep.subr.mxu0 0.0
        %1537 = vmatpush1.msra.mxu0 0.0
        %1538 = vmatprep.subr.mxu0 0.0
        %1539 = vmatpush1.msra.mxu0 0.0
        %1540 = vmatprep.subr.mxu0 0.0
        %1541 = vmatpush1.msra.mxu0 0.0
        %1542 = vmatprep.subr.mxu0 0.0
        %1543 = vmatpush1.msra.mxu0 0.0
        %1544 = vmatprep.subr.mxu0 0.0
        %1545 = vmatpush1.msra.mxu0 0.0
        %1546 = vmatprep.subr.mxu0 0.0
        %1547 = vmatpush1.msra.mxu0 0.0
        %1548 = vmatprep.subr.mxu0 0.0
        %1549 = vmatpush1.msra.mxu0 0.0
        %1550 = vmatprep.subr.mxu0 0.0
        %1551 = vmatpush1.msra.mxu0 0.0
        %1552 = vmatprep.subr.mxu0 0.0
        %1553 = vmatpush1.msra.mxu0 0.0
        %1554 = vmatprep.subr.mxu0 0.0
        %1555 = vmatpush1.msra.mxu0 0.0
        %1556 = vmatprep.mubr.f32.mxu0 0.0
        %1557 = vmatmul.mubr.f32.gmra.mrb[0].mxu0 %v1490
        %v1558 = vpop.f32.mrb[0].mxu0
        %v1559 = vadd.f32 0.0, %v1558
        %v1560 = vpop.f32.mrb[0].mxu0
        %1561 = vdwg.mxu0
        %1564 = vset.pattern.permute.xlu0 0
        %1565 = vperm.xlu0 %1564, %v1356
        %v1566 = vpop.permute.xlu0 %1565
        %1567 = vset.pattern.permute.xlu0 0
        %1568 = vperm.xlu0 %1567, %v1357
        %v1569 = vpop.permute.xlu0 %1568
        %v1570 = vlaneseq
        %v1571 = vshrl.u32 %v1570, 7
        %v1572 = vsub.s32 %v859, %v1571
        %v1573 = vrot.slane %v1566, %v1572
        %v1574 = vlaneseq
        %v1575 = vshrl.u32 %v1574, 7
        %v1576 = vsub.s32 %v864, %v1575
        %v1577 = vrot.slane %v1569, %v1576
        %v1578 = vsel %vm869, %v1577, %v1573
        %v1579 = vsel %vm949, %v1578, 0
        %1581 = vmatprep.subr.mxu0 0.0
        %1582 = vmatpush1.msra.mxu0 %v1372
        %1583 = vmatprep.subr.mxu0 0.0
        %1584 = vmatpush1.msra.mxu0 %v1373
        %1585 = vmatprep.subr.mxu0 0.0
        %1586 = vmatpush1.msra.mxu0 0.0
        %1587 = vmatprep.subr.mxu0 0.0
        %1588 = vmatpush1.msra.mxu0 0.0
        %1589 = vmatprep.subr.mxu0 0.0
        %1590 = vmatpush1.msra.mxu0 0.0
        %1591 = vmatprep.subr.mxu0 0.0
        %1592 = vmatpush1.msra.mxu0 0.0
        %1593 = vmatprep.subr.mxu0 0.0
        %1594 = vmatpush1.msra.mxu0 0.0
        %1595 = vmatprep.subr.mxu0 0.0
        %1596 = vmatpush1.msra.mxu0 0.0
        %1597 = vmatprep.subr.mxu0 0.0
        %1598 = vmatpush1.msra.mxu0 0.0
        %1599 = vmatprep.subr.mxu0 0.0
        %1600 = vmatpush1.msra.mxu0 0.0
        %1601 = vmatprep.subr.mxu0 0.0
        %1602 = vmatpush1.msra.mxu0 0.0
        %1603 = vmatprep.subr.mxu0 0.0
        %1604 = vmatpush1.msra.mxu0 0.0
        %1605 = vmatprep.subr.mxu0 0.0
        %1606 = vmatpush1.msra.mxu0 0.0
        %1607 = vmatprep.subr.mxu0 0.0
        %1608 = vmatpush1.msra.mxu0 0.0
        %1609 = vmatprep.subr.mxu0 0.0
        %1610 = vmatpush1.msra.mxu0 0.0
        %1611 = vmatprep.subr.mxu0 0.0
        %1612 = vmatpush1.msra.mxu0 0.0
        %1613 = vmatprep.subr.mxu0 0.0
        %1614 = vmatpush1.msra.mxu0 0.0
        %1615 = vmatprep.subr.mxu0 0.0
        %1616 = vmatpush1.msra.mxu0 0.0
        %1617 = vmatprep.subr.mxu0 0.0
        %1618 = vmatpush1.msra.mxu0 0.0
        %1619 = vmatprep.subr.mxu0 0.0
        %1620 = vmatpush1.msra.mxu0 0.0
        %1621 = vmatprep.subr.mxu0 0.0
        %1622 = vmatpush1.msra.mxu0 0.0
        %1623 = vmatprep.subr.mxu0 0.0
        %1624 = vmatpush1.msra.mxu0 0.0
        %1625 = vmatprep.subr.mxu0 0.0
        %1626 = vmatpush1.msra.mxu0 0.0
        %1627 = vmatprep.subr.mxu0 0.0
        %1628 = vmatpush1.msra.mxu0 0.0
        %1629 = vmatprep.subr.mxu0 0.0
        %1630 = vmatpush1.msra.mxu0 0.0
        %1631 = vmatprep.subr.mxu0 0.0
        %1632 = vmatpush1.msra.mxu0 0.0
        %1633 = vmatprep.subr.mxu0 0.0
        %1634 = vmatpush1.msra.mxu0 0.0
        %1635 = vmatprep.subr.mxu0 0.0
        %1636 = vmatpush1.msra.mxu0 0.0
        %1637 = vmatprep.subr.mxu0 0.0
        %1638 = vmatpush1.msra.mxu0 0.0
        %1639 = vmatprep.subr.mxu0 0.0
        %1640 = vmatpush1.msra.mxu0 0.0
        %1641 = vmatprep.subr.mxu0 0.0
        %1642 = vmatpush1.msra.mxu0 0.0
        %1643 = vmatprep.subr.mxu0 0.0
        %1644 = vmatpush1.msra.mxu0 0.0
        %1645 = vmatprep.mubr.f32.mxu0 0.0
        %1646 = vmatmul.mubr.f32.gmra.mrb[0].mxu0 %v1579
        %v1647 = vpop.f32.mrb[0].mxu0
        %v1648 = vadd.f32 0.0, %v1647
        %v1649 = vpop.f32.mrb[0].mxu0
        %1650 = vdwg.mxu0
        %1653 = vset.pattern.permute.xlu0 0
        %1654 = vperm.xlu0 %1653, %v1358
        %v1655 = vpop.permute.xlu0 %1654
        %1656 = vset.pattern.permute.xlu0 0
        %1657 = vperm.xlu0 %1656, %v1359
        %v1658 = vpop.permute.xlu0 %1657
        %v1659 = vlaneseq
        %v1660 = vshrl.u32 %v1659, 7
        %v1661 = vsub.s32 %v859, %v1660
        %v1662 = vrot.slane %v1655, %v1661
        %v1663 = vlaneseq
        %v1664 = vshrl.u32 %v1663, 7
        %v1665 = vsub.s32 %v864, %v1664
        %v1666 = vrot.slane %v1658, %v1665
        %v1667 = vsel %vm869, %v1666, %v1662
        %v1668 = vsel %vm949, %v1667, 0
        %1670 = vmatprep.subr.mxu0 0.0
        %1671 = vmatpush1.msra.mxu0 %v1374
        %1672 = vmatprep.subr.mxu0 0.0
        %1673 = vmatpush1.msra.mxu0 %v1375
        %1674 = vmatprep.subr.mxu0 0.0
        %1675 = vmatpush1.msra.mxu0 0.0
        %1676 = vmatprep.subr.mxu0 0.0
        %1677 = vmatpush1.msra.mxu0 0.0
        %1678 = vmatprep.subr.mxu0 0.0
        %1679 = vmatpush1.msra.mxu0 0.0
        %1680 = vmatprep.subr.mxu0 0.0
        %1681 = vmatpush1.msra.mxu0 0.0
        %1682 = vmatprep.subr.mxu0 0.0
        %1683 = vmatpush1.msra.mxu0 0.0
        %1684 = vmatprep.subr.mxu0 0.0
        %1685 = vmatpush1.msra.mxu0 0.0
        %1686 = vmatprep.subr.mxu0 0.0
        %1687 = vmatpush1.msra.mxu0 0.0
        %1688 = vmatprep.subr.mxu0 0.0
        %1689 = vmatpush1.msra.mxu0 0.0
        %1690 = vmatprep.subr.mxu0 0.0
        %1691 = vmatpush1.msra.mxu0 0.0
        %1692 = vmatprep.subr.mxu0 0.0
        %1693 = vmatpush1.msra.mxu0 0.0
        %1694 = vmatprep.subr.mxu0 0.0
        %1695 = vmatpush1.msra.mxu0 0.0
        %1696 = vmatprep.subr.mxu0 0.0
        %1697 = vmatpush1.msra.mxu0 0.0
        %1698 = vmatprep.subr.mxu0 0.0
        %1699 = vmatpush1.msra.mxu0 0.0
        %1700 = vmatprep.subr.mxu0 0.0
        %1701 = vmatpush1.msra.mxu0 0.0
        %1702 = vmatprep.subr.mxu0 0.0
        %1703 = vmatpush1.msra.mxu0 0.0
        %1704 = vmatprep.subr.mxu0 0.0
        %1705 = vmatpush1.msra.mxu0 0.0
        %1706 = vmatprep.subr.mxu0 0.0
        %1707 = vmatpush1.msra.mxu0 0.0
        %1708 = vmatprep.subr.mxu0 0.0
        %1709 = vmatpush1.msra.mxu0 0.0
        %1710 = vmatprep.subr.mxu0 0.0
        %1711 = vmatpush1.msra.mxu0 0.0
        %1712 = vmatprep.subr.mxu0 0.0
        %1713 = vmatpush1.msra.mxu0 0.0
        %1714 = vmatprep.subr.mxu0 0.0
        %1715 = vmatpush1.msra.mxu0 0.0
        %1716 = vmatprep.subr.mxu0 0.0
        %1717 = vmatpush1.msra.mxu0 0.0
        %1718 = vmatprep.subr.mxu0 0.0
        %1719 = vmatpush1.msra.mxu0 0.0
        %1720 = vmatprep.subr.mxu0 0.0
        %1721 = vmatpush1.msra.mxu0 0.0
        %1722 = vmatprep.subr.mxu0 0.0
        %1723 = vmatpush1.msra.mxu0 0.0
        %1724 = vmatprep.subr.mxu0 0.0
        %1725 = vmatpush1.msra.mxu0 0.0
        %1726 = vmatprep.subr.mxu0 0.0
        %1727 = vmatpush1.msra.mxu0 0.0
        %1728 = vmatprep.subr.mxu0 0.0
        %1729 = vmatpush1.msra.mxu0 0.0
        %1730 = vmatprep.subr.mxu0 0.0
        %1731 = vmatpush1.msra.mxu0 0.0
        %1732 = vmatprep.subr.mxu0 0.0
        %1733 = vmatpush1.msra.mxu0 0.0
        %1734 = vmatprep.mubr.f32.mxu0 0.0
        %1735 = vmatmul.mubr.f32.gmra.mrb[0].mxu0 %v1668
        %v1736 = vpop.f32.mrb[0].mxu0
        %v1737 = vadd.f32 0.0, %v1736
        %v1738 = vpop.f32.mrb[0].mxu0
        %1739 = vdwg.mxu0
        %1742 = vset.pattern.permute.xlu0 0
        %1743 = vperm.xlu0 %1742, %v1360
        %v1744 = vpop.permute.xlu0 %1743
        %1745 = vset.pattern.permute.xlu0 0
        %1746 = vperm.xlu0 %1745, %v1361
        %v1747 = vpop.permute.xlu0 %1746
        %v1748 = vlaneseq
        %v1749 = vshrl.u32 %v1748, 7
        %v1750 = vsub.s32 %v859, %v1749
        %v1751 = vrot.slane %v1744, %v1750
        %v1752 = vlaneseq
        %v1753 = vshrl.u32 %v1752, 7
        %v1754 = vsub.s32 %v864, %v1753
        %v1755 = vrot.slane %v1747, %v1754
        %v1756 = vsel %vm869, %v1755, %v1751
        %v1757 = vsel %vm949, %v1756, 0
        %1759 = vmatprep.subr.mxu0 0.0
        %1760 = vmatpush1.msra.mxu0 %v1376
        %1761 = vmatprep.subr.mxu0 0.0
        %1762 = vmatpush1.msra.mxu0 %v1377
        %1763 = vmatprep.subr.mxu0 0.0
        %1764 = vmatpush1.msra.mxu0 0.0
        %1765 = vmatprep.subr.mxu0 0.0
        %1766 = vmatpush1.msra.mxu0 0.0
        %1767 = vmatprep.subr.mxu0 0.0
        %1768 = vmatpush1.msra.mxu0 0.0
        %1769 = vmatprep.subr.mxu0 0.0
        %1770 = vmatpush1.msra.mxu0 0.0
        %1771 = vmatprep.subr.mxu0 0.0
        %1772 = vmatpush1.msra.mxu0 0.0
        %1773 = vmatprep.subr.mxu0 0.0
        %1774 = vmatpush1.msra.mxu0 0.0
        %1775 = vmatprep.subr.mxu0 0.0
        %1776 = vmatpush1.msra.mxu0 0.0
        %1777 = vmatprep.subr.mxu0 0.0
        %1778 = vmatpush1.msra.mxu0 0.0
        %1779 = vmatprep.subr.mxu0 0.0
        %1780 = vmatpush1.msra.mxu0 0.0
        %1781 = vmatprep.subr.mxu0 0.0
        %1782 = vmatpush1.msra.mxu0 0.0
        %1783 = vmatprep.subr.mxu0 0.0
        %1784 = vmatpush1.msra.mxu0 0.0
        %1785 = vmatprep.subr.mxu0 0.0
        %1786 = vmatpush1.msra.mxu0 0.0
        %1787 = vmatprep.subr.mxu0 0.0
        %1788 = vmatpush1.msra.mxu0 0.0
        %1789 = vmatprep.subr.mxu0 0.0
        %1790 = vmatpush1.msra.mxu0 0.0
        %1791 = vmatprep.subr.mxu0 0.0
        %1792 = vmatpush1.msra.mxu0 0.0
        %1793 = vmatprep.subr.mxu0 0.0
        %1794 = vmatpush1.msra.mxu0 0.0
        %1795 = vmatprep.subr.mxu0 0.0
        %1796 = vmatpush1.msra.mxu0 0.0
        %1797 = vmatprep.subr.mxu0 0.0
        %1798 = vmatpush1.msra.mxu0 0.0
        %1799 = vmatprep.subr.mxu0 0.0
        %1800 = vmatpush1.msra.mxu0 0.0
        %1801 = vmatprep.subr.mxu0 0.0
        %1802 = vmatpush1.msra.mxu0 0.0
        %1803 = vmatprep.subr.mxu0 0.0
        %1804 = vmatpush1.msra.mxu0 0.0
        %1805 = vmatprep.subr.mxu0 0.0
        %1806 = vmatpush1.msra.mxu0 0.0
        %1807 = vmatprep.subr.mxu0 0.0
        %1808 = vmatpush1.msra.mxu0 0.0
        %1809 = vmatprep.subr.mxu0 0.0
        %1810 = vmatpush1.msra.mxu0 0.0
        %1811 = vmatprep.subr.mxu0 0.0
        %1812 = vmatpush1.msra.mxu0 0.0
        %1813 = vmatprep.subr.mxu0 0.0
        %1814 = vmatpush1.msra.mxu0 0.0
        %1815 = vmatprep.subr.mxu0 0.0
        %1816 = vmatpush1.msra.mxu0 0.0
        %1817 = vmatprep.subr.mxu0 0.0
        %1818 = vmatpush1.msra.mxu0 0.0
        %1819 = vmatprep.subr.mxu0 0.0
        %1820 = vmatpush1.msra.mxu0 0.0
        %1821 = vmatprep.subr.mxu0 0.0
        %1822 = vmatpush1.msra.mxu0 0.0
        %1823 = vmatprep.mubr.f32.mxu0 0.0
        %1824 = vmatmul.mubr.f32.gmra.mrb[0].mxu0 %v1757
        %v1825 = vpop.f32.mrb[0].mxu0
        %v1826 = vadd.f32 0.0, %v1825
        %v1827 = vpop.f32.mrb[0].mxu0
        %1828 = vdwg.mxu0
        %1831 = vset.pattern.permute.xlu0 0
        %1832 = vperm.xlu0 %1831, %v1362
        %v1833 = vpop.permute.xlu0 %1832
        %1834 = vset.pattern.permute.xlu0 0
        %1835 = vperm.xlu0 %1834, %v1363
        %v1836 = vpop.permute.xlu0 %1835
        %v1837 = vlaneseq
        %v1838 = vshrl.u32 %v1837, 7
        %v1839 = vsub.s32 %v859, %v1838
        %v1840 = vrot.slane %v1833, %v1839
        %v1841 = vlaneseq
        %v1842 = vshrl.u32 %v1841, 7
        %v1843 = vsub.s32 %v864, %v1842
        %v1844 = vrot.slane %v1836, %v1843
        %v1845 = vsel %vm869, %v1844, %v1840
        %v1846 = vsel %vm949, %v1845, 0
        %1848 = vmatprep.subr.mxu0 0.0
        %1849 = vmatpush1.msra.mxu0 %v1378
        %1850 = vmatprep.subr.mxu0 0.0
        %1851 = vmatpush1.msra.mxu0 %v1379
        %1852 = vmatprep.subr.mxu0 0.0
        %1853 = vmatpush1.msra.mxu0 0.0
        %1854 = vmatprep.subr.mxu0 0.0
        %1855 = vmatpush1.msra.mxu0 0.0
        %1856 = vmatprep.subr.mxu0 0.0
        %1857 = vmatpush1.msra.mxu0 0.0
        %1858 = vmatprep.subr.mxu0 0.0
        %1859 = vmatpush1.msra.mxu0 0.0
        %1860 = vmatprep.subr.mxu0 0.0
        %1861 = vmatpush1.msra.mxu0 0.0
        %1862 = vmatprep.subr.mxu0 0.0
        %1863 = vmatpush1.msra.mxu0 0.0
        %1864 = vmatprep.subr.mxu0 0.0
        %1865 = vmatpush1.msra.mxu0 0.0
        %1866 = vmatprep.subr.mxu0 0.0
        %1867 = vmatpush1.msra.mxu0 0.0
        %1868 = vmatprep.subr.mxu0 0.0
        %1869 = vmatpush1.msra.mxu0 0.0
        %1870 = vmatprep.subr.mxu0 0.0
        %1871 = vmatpush1.msra.mxu0 0.0
        %1872 = vmatprep.subr.mxu0 0.0
        %1873 = vmatpush1.msra.mxu0 0.0
        %1874 = vmatprep.subr.mxu0 0.0
        %1875 = vmatpush1.msra.mxu0 0.0
        %1876 = vmatprep.subr.mxu0 0.0
        %1877 = vmatpush1.msra.mxu0 0.0
        %1878 = vmatprep.subr.mxu0 0.0
        %1879 = vmatpush1.msra.mxu0 0.0
        %1880 = vmatprep.subr.mxu0 0.0
        %1881 = vmatpush1.msra.mxu0 0.0
        %1882 = vmatprep.subr.mxu0 0.0
        %1883 = vmatpush1.msra.mxu0 0.0
        %1884 = vmatprep.subr.mxu0 0.0
        %1885 = vmatpush1.msra.mxu0 0.0
        %1886 = vmatprep.subr.mxu0 0.0
        %1887 = vmatpush1.msra.mxu0 0.0
        %1888 = vmatprep.subr.mxu0 0.0
        %1889 = vmatpush1.msra.mxu0 0.0
        %1890 = vmatprep.subr.mxu0 0.0
        %1891 = vmatpush1.msra.mxu0 0.0
        %1892 = vmatprep.subr.mxu0 0.0
        %1893 = vmatpush1.msra.mxu0 0.0
        %1894 = vmatprep.subr.mxu0 0.0
        %1895 = vmatpush1.msra.mxu0 0.0
        %1896 = vmatprep.subr.mxu0 0.0
        %1897 = vmatpush1.msra.mxu0 0.0
        %1898 = vmatprep.subr.mxu0 0.0
        %1899 = vmatpush1.msra.mxu0 0.0
        %1900 = vmatprep.subr.mxu0 0.0
        %1901 = vmatpush1.msra.mxu0 0.0
        %1902 = vmatprep.subr.mxu0 0.0
        %1903 = vmatpush1.msra.mxu0 0.0
        %1904 = vmatprep.subr.mxu0 0.0
        %1905 = vmatpush1.msra.mxu0 0.0
        %1906 = vmatprep.subr.mxu0 0.0
        %1907 = vmatpush1.msra.mxu0 0.0
        %1908 = vmatprep.subr.mxu0 0.0
        %1909 = vmatpush1.msra.mxu0 0.0
        %1910 = vmatprep.subr.mxu0 0.0
        %1911 = vmatpush1.msra.mxu0 0.0
        %1912 = vmatprep.mubr.f32.mxu0 0.0
        %1913 = vmatmul.mubr.f32.gmra.mrb[0].mxu0 %v1846
        %v1914 = vpop.f32.mrb[0].mxu0
        %v1915 = vadd.f32 0.0, %v1914
        %v1916 = vpop.f32.mrb[0].mxu0
        %1917 = vdwg.mxu0
        %1920 = vset.pattern.permute.xlu0 0
        %1921 = vperm.xlu0 %1920, %v1364
        %v1922 = vpop.permute.xlu0 %1921
        %1923 = vset.pattern.permute.xlu0 0
        %1924 = vperm.xlu0 %1923, %v1365
        %v1925 = vpop.permute.xlu0 %1924
        %v1926 = vlaneseq
        %v1927 = vshrl.u32 %v1926, 7
        %v1928 = vsub.s32 %v859, %v1927
        %v1929 = vrot.slane %v1922, %v1928
        %v1930 = vlaneseq
        %v1931 = vshrl.u32 %v1930, 7
        %v1932 = vsub.s32 %v864, %v1931
        %v1933 = vrot.slane %v1925, %v1932
        %v1934 = vsel %vm869, %v1933, %v1929
        %v1935 = vsel %vm949, %v1934, 0
        %1937 = vmatprep.subr.mxu0 0.0
        %1938 = vmatpush1.msra.mxu0 %v1380
        %1939 = vmatprep.subr.mxu0 0.0
        %1940 = vmatpush1.msra.mxu0 %v1381
        %1941 = vmatprep.subr.mxu0 0.0
        %1942 = vmatpush1.msra.mxu0 0.0
        %1943 = vmatprep.subr.mxu0 0.0
        %1944 = vmatpush1.msra.mxu0 0.0
        %1945 = vmatprep.subr.mxu0 0.0
        %1946 = vmatpush1.msra.mxu0 0.0
        %1947 = vmatprep.subr.mxu0 0.0
        %1948 = vmatpush1.msra.mxu0 0.0
        %1949 = vmatprep.subr.mxu0 0.0
        %1950 = vmatpush1.msra.mxu0 0.0
        %1951 = vmatprep.subr.mxu0 0.0
        %1952 = vmatpush1.msra.mxu0 0.0
        %1953 = vmatprep.subr.mxu0 0.0
        %1954 = vmatpush1.msra.mxu0 0.0
        %1955 = vmatprep.subr.mxu0 0.0
        %1956 = vmatpush1.msra.mxu0 0.0
        %1957 = vmatprep.subr.mxu0 0.0
        %1958 = vmatpush1.msra.mxu0 0.0
        %1959 = vmatprep.subr.mxu0 0.0
        %1960 = vmatpush1.msra.mxu0 0.0
        %1961 = vmatprep.subr.mxu0 0.0
        %1962 = vmatpush1.msra.mxu0 0.0
        %1963 = vmatprep.subr.mxu0 0.0
        %1964 = vmatpush1.msra.mxu0 0.0
        %1965 = vmatprep.subr.mxu0 0.0
        %1966 = vmatpush1.msra.mxu0 0.0
        %1967 = vmatprep.subr.mxu0 0.0
        %1968 = vmatpush1.msra.mxu0 0.0
        %1969 = vmatprep.subr.mxu0 0.0
        %1970 = vmatpush1.msra.mxu0 0.0
        %1971 = vmatprep.subr.mxu0 0.0
        %1972 = vmatpush1.msra.mxu0 0.0
        %1973 = vmatprep.subr.mxu0 0.0
        %1974 = vmatpush1.msra.mxu0 0.0
        %1975 = vmatprep.subr.mxu0 0.0
        %1976 = vmatpush1.msra.mxu0 0.0
        %1977 = vmatprep.subr.mxu0 0.0
        %1978 = vmatpush1.msra.mxu0 0.0
        %1979 = vmatprep.subr.mxu0 0.0
        %1980 = vmatpush1.msra.mxu0 0.0
        %1981 = vmatprep.subr.mxu0 0.0
        %1982 = vmatpush1.msra.mxu0 0.0
        %1983 = vmatprep.subr.mxu0 0.0
        %1984 = vmatpush1.msra.mxu0 0.0
        %1985 = vmatprep.subr.mxu0 0.0
        %1986 = vmatpush1.msra.mxu0 0.0
        %1987 = vmatprep.subr.mxu0 0.0
        %1988 = vmatpush1.msra.mxu0 0.0
        %1989 = vmatprep.subr.mxu0 0.0
        %1990 = vmatpush1.msra.mxu0 0.0
        %1991 = vmatprep.subr.mxu0 0.0
        %1992 = vmatpush1.msra.mxu0 0.0
        %1993 = vmatprep.subr.mxu0 0.0
        %1994 = vmatpush1.msra.mxu0 0.0
        %1995 = vmatprep.subr.mxu0 0.0
        %1996 = vmatpush1.msra.mxu0 0.0
        %1997 = vmatprep.subr.mxu0 0.0
        %1998 = vmatpush1.msra.mxu0 0.0
        %1999 = vmatprep.subr.mxu0 0.0
        %2000 = vmatpush1.msra.mxu0 0.0
        %2001 = vmatprep.mubr.f32.mxu0 0.0
        %2002 = vmatmul.mubr.f32.gmra.mrb[0].mxu0 %v1935
        %v2003 = vpop.f32.mrb[0].mxu0
        %v2004 = vadd.f32 0.0, %v2003
        %v2005 = vpop.f32.mrb[0].mxu0
        %2006 = vdwg.mxu0
        %2009 = vset.pattern.permute.xlu0 0
        %2010 = vperm.xlu0 %2009, %v1366
        %v2011 = vpop.permute.xlu0 %2010
        %2012 = vset.pattern.permute.xlu0 0
        %2013 = vperm.xlu0 %2012, %v1367
        %v2014 = vpop.permute.xlu0 %2013
        %v2015 = vlaneseq
        %v2016 = vshrl.u32 %v2015, 7
        %v2017 = vsub.s32 %v859, %v2016
        %v2018 = vrot.slane %v2011, %v2017
        %v2019 = vlaneseq
        %v2020 = vshrl.u32 %v2019, 7
        %v2021 = vsub.s32 %v864, %v2020
        %v2022 = vrot.slane %v2014, %v2021
        %v2023 = vsel %vm869, %v2022, %v2018
        %v2024 = vsel %vm949, %v2023, 0
        %2026 = vmatprep.subr.mxu0 0.0
        %2027 = vmatpush1.msra.mxu0 %v1382
        %2028 = vmatprep.subr.mxu0 0.0
        %2029 = vmatpush1.msra.mxu0 %v1383
        %2030 = vmatprep.subr.mxu0 0.0
        %2031 = vmatpush1.msra.mxu0 0.0
        %2032 = vmatprep.subr.mxu0 0.0
        %2033 = vmatpush1.msra.mxu0 0.0
        %2034 = vmatprep.subr.mxu0 0.0
        %2035 = vmatpush1.msra.mxu0 0.0
        %2036 = vmatprep.subr.mxu0 0.0
        %2037 = vmatpush1.msra.mxu0 0.0
        %2038 = vmatprep.subr.mxu0 0.0
        %2039 = vmatpush1.msra.mxu0 0.0
        %2040 = vmatprep.subr.mxu0 0.0
        %2041 = vmatpush1.msra.mxu0 0.0
        %2042 = vmatprep.subr.mxu0 0.0
        %2043 = vmatpush1.msra.mxu0 0.0
        %2044 = vmatprep.subr.mxu0 0.0
        %2045 = vmatpush1.msra.mxu0 0.0
        %2046 = vmatprep.subr.mxu0 0.0
        %2047 = vmatpush1.msra.mxu0 0.0
        %2048 = vmatprep.subr.mxu0 0.0
        %2049 = vmatpush1.msra.mxu0 0.0
        %2050 = vmatprep.subr.mxu0 0.0
        %2051 = vmatpush1.msra.mxu0 0.0
        %2052 = vmatprep.subr.mxu0 0.0
        %2053 = vmatpush1.msra.mxu0 0.0
        %2054 = vmatprep.subr.mxu0 0.0
        %2055 = vmatpush1.msra.mxu0 0.0
        %2056 = vmatprep.subr.mxu0 0.0
        %2057 = vmatpush1.msra.mxu0 0.0
        %2058 = vmatprep.subr.mxu0 0.0
        %2059 = vmatpush1.msra.mxu0 0.0
        %2060 = vmatprep.subr.mxu0 0.0
        %2061 = vmatpush1.msra.mxu0 0.0
        %2062 = vmatprep.subr.mxu0 0.0
        %2063 = vmatpush1.msra.mxu0 0.0
        %2064 = vmatprep.subr.mxu0 0.0
        %2065 = vmatpush1.msra.mxu0 0.0
        %2066 = vmatprep.subr.mxu0 0.0
        %2067 = vmatpush1.msra.mxu0 0.0
        %2068 = vmatprep.subr.mxu0 0.0
        %2069 = vmatpush1.msra.mxu0 0.0
        %2070 = vmatprep.subr.mxu0 0.0
        %2071 = vmatpush1.msra.mxu0 0.0
        %2072 = vmatprep.subr.mxu0 0.0
        %2073 = vmatpush1.msra.mxu0 0.0
        %2074 = vmatprep.subr.mxu0 0.0
        %2075 = vmatpush1.msra.mxu0 0.0
        %2076 = vmatprep.subr.mxu0 0.0
        %2077 = vmatpush1.msra.mxu0 0.0
        %2078 = vmatprep.subr.mxu0 0.0
        %2079 = vmatpush1.msra.mxu0 0.0
        %2080 = vmatprep.subr.mxu0 0.0
        %2081 = vmatpush1.msra.mxu0 0.0
        %2082 = vmatprep.subr.mxu0 0.0
        %2083 = vmatpush1.msra.mxu0 0.0
        %2084 = vmatprep.subr.mxu0 0.0
        %2085 = vmatpush1.msra.mxu0 0.0
        %2086 = vmatprep.subr.mxu0 0.0
        %2087 = vmatpush1.msra.mxu0 0.0
        %2088 = vmatprep.subr.mxu0 0.0
        %2089 = vmatpush1.msra.mxu0 0.0
        %2090 = vmatprep.mubr.f32.mxu0 0.0
        %2091 = vmatmul.mubr.f32.gmra.mrb[0].mxu0 %v2024
        %v2092 = vpop.f32.mrb[0].mxu0
        %v2093 = vadd.f32 0.0, %v2092
        %v2094 = vpop.f32.mrb[0].mxu0
        %2095 = vdwg.mxu0
        %2096 = vst [vmem:[%s501] sm:$0x1] %v1470
        %2097 = vst [vmem:[%s501 + $0x1] sm:$0x1] %v1559
        %2098 = vst [vmem:[%s501 + $0x2] sm:$0x1] %v1648
        %2099 = vst [vmem:[%s501 + $0x3] sm:$0x1] %v1737
        %2100 = vst [vmem:[%s501 + $0x4] sm:$0x1] %v1826
        %2101 = vst [vmem:[%s501 + $0x5] sm:$0x1] %v1915
        %2102 = vst [vmem:[%s501 + $0x6] sm:$0x1] %v2004
        %2103 = vst [vmem:[%s501 + $0x7] sm:$0x1] %v2093
        %v2104 = vsel %vm934, %v1489, %v1400
        %v2105 = vsel %vm936, %v1578, %v2104
        %v2106 = vsel %vm938, %v1667, %v2105
        %v2107 = vsel %vm940, %v1756, %v2106
        %v2108 = vsel %vm942, %v1845, %v2107
        %v2109 = vsel %vm944, %v1934, %v2108
        %v2110 = vsel %vm946, %v2023, %v2109
        %2112 = vst.msk [vmem:[%s508] sm:$0xff] %vm949, %v2110
        %v2113 = vadd.f32 %v536, %v2110
        %2114 = vst.msk [vmem:[%s515] sm:$0xff] %vm949, %v2113
        %s2115 = sand.u32 %s216, 1
        %s2116 = scalar_lea.sflag [#allocation4], %s2115
        %s2117 = sand.u32 %s216, 1
        %s2118 = smul.addr %s2117, 8
        %s2119 = scalar_lea.vmem [#allocation11], %s2118
        %s2120 = sand.u32 %s36, 1
        %s2121 = scalar_lea.sflag [#allocation13], %s2120
        %s2122 = sand.u32 %s242, 1
        %s2123 = smul.addr %s2122, 8
        %s2124 = scalar_lea.vmem [#allocation12], %s2123
        %s2125 = sand.u32 %s36, 1
        %s2126 = scalar_lea.sflag [#allocation13], %s2125
        %s2127 = sand.u32 %s268, 1
        %s2128 = smul.addr %s2127, 8
        %s2129 = scalar_lea.vmem [#allocation14], %s2128
        // Predicated region
        $region69: #{tpu_custom_call.1} parent=47 // pred_check
          %p2130 = pneg %p226
        $region70: #{tpu_custom_call.1} parent=47 // pred_check_branch
          %2132 = sbr.rel (%p2130) target = $region72
        $region71: #{tpu_custom_call.1} parent=47 // pred_region
          %s2133 = smul.u32 8, %s36
          %s2135 = ssub.s32 128, 128
          %2136 = vsyncadd %s2116, %s2135
          %s2137 = smul.addr %s2133, 16
          %s2138 = scalar_lea.hbm %s7, %s2137
          %s2139 = sshll.u32 %s2119, 4
          %s2140 = int_to_ptr.vmem [resolvable:$true] %s2139
          %2145 = dma.vmem_to_hbm [thread:$0]  %s2140, 128, %s2138, %s2116, 16, 16, 1
        $region72: #{tpu_custom_call.1} parent=47 // pred_fallthru
          _
        // Predicated region
        $region73: #{tpu_custom_call.1} parent=47 // pred_check
          %p2146 = pneg %p252
        $region74: #{tpu_custom_call.1} parent=47 // pred_check_branch
          %2148 = sbr.rel (%p2146) target = $region76
        $region75: #{tpu_custom_call.1} parent=47 // pred_region
          %s2150 = ssub.s32 128, 128
          %2151 = vsyncadd %s2121, %s2150
          %s2152 = smul.addr %s36, 128
          %s2153 = scalar_lea.hbm %s8, %s2152
          %s2155 = sshll.u32 %s2124, 4
          %s2156 = int_to_ptr.vmem [resolvable:$true] %s2155
          %2158 = dma.vmem_to_hbm [thread:$0]  %s2156, 128, %s2153, %s2121
        $region76: #{tpu_custom_call.1} parent=47 // pred_fallthru
          _
        // Predicated region
        $region77: #{tpu_custom_call.1} parent=47 // pred_check
          %p2159 = pneg %p278
        $region78: #{tpu_custom_call.1} parent=47 // pred_check_branch
          %2161 = sbr.rel (%p2159) target = $region80
        $region79: #{tpu_custom_call.1} parent=47 // pred_region
          %s2163 = ssub.s32 128, 128
          %2164 = vsyncadd %s2126, %s2163
          %s2165 = smul.addr %s36, 128
          %s2166 = scalar_lea.hbm %s9, %s2165
          %s2168 = sshll.u32 %s2129, 4
          %s2169 = int_to_ptr.vmem [resolvable:$true] %s2168
          %2171 = dma.vmem_to_hbm [thread:$0]  %s2169, 128, %s2166, %s2126
        $region80: #{tpu_custom_call.1} parent=47 // pred_fallthru
          _
      $region48: #{tpu_custom_call.1} parent=5 // pred_fallthru
        _
      %p2172 = scmp.le.s32.totalorder 2, %s31
      // Predicated region
      $region81: #{tpu_custom_call.1} parent=5 // pred_check
        %p2173 = pneg %p2172
      $region82: #{tpu_custom_call.1} parent=5 // pred_check_branch
        %2175 = sbr.rel (%p2173) target = $region84
      $region83: #{tpu_custom_call.1} parent=5 // pred_region
        %s2176 = ssub.s32 %s31, 2
        // Predicated region
        $region85: #{tpu_custom_call.1} parent=83 // pred_check
          %p2177 = pneg %p232
        $region86: #{tpu_custom_call.1} parent=83 // pred_check_branch
          %2179 = sbr.rel (%p2177) target = $region88
        $region87: #{tpu_custom_call.1} parent=83 // pred_region
          %s2180 = sand.u32 %s217, 1
          %s2181 = scalar_lea.sflag [#allocation4], %s2180
          %s2182 = sand.u32 %s217, 1
          %s2183 = smul.addr %s2182, 8
          %s2184 = scalar_lea.vmem [#allocation11], %s2183
          %2185 = dma.done %s2181, 128
        $region88: #{tpu_custom_call.1} parent=83 // pred_fallthru
          _
        // Predicated region
        $region89: #{tpu_custom_call.1} parent=83 // pred_check
          %p2186 = pneg %p258
        $region90: #{tpu_custom_call.1} parent=83 // pred_check_branch
          %2188 = sbr.rel (%p2186) target = $region92
        $region91: #{tpu_custom_call.1} parent=83 // pred_region
          %s2189 = sand.u32 %s37, 1
          %s2190 = scalar_lea.sflag [#allocation13], %s2189
          %s2191 = sand.u32 %s243, 1
          %s2192 = smul.addr %s2191, 8
          %s2193 = scalar_lea.vmem [#allocation12], %s2192
          %2194 = dma.done %s2190, 128
        $region92: #{tpu_custom_call.1} parent=83 // pred_fallthru
          _
        // Predicated region
        $region93: #{tpu_custom_call.1} parent=83 // pred_check
          %p2195 = pneg %p284
        $region94: #{tpu_custom_call.1} parent=83 // pred_check_branch
          %2197 = sbr.rel (%p2195) target = $region96
        $region95: #{tpu_custom_call.1} parent=83 // pred_region
          %s2198 = sand.u32 %s37, 1
          %s2199 = scalar_lea.sflag [#allocation13], %s2198
          %s2200 = sand.u32 %s269, 1
          %s2201 = smul.addr %s2200, 8
          %s2202 = scalar_lea.vmem [#allocation14], %s2201
          %2203 = dma.done %s2199, 128
        $region96: #{tpu_custom_call.1} parent=83 // pred_fallthru
          _
      $region84: #{tpu_custom_call.1} parent=5 // pred_fallthru
        _
    $region6: #{tpu_custom_call.1} parent=1 // loop_footer
      %s35 = sadd.s32 1, %s31
    $region7: #{tpu_custom_call.1} parent=1 // loop_footer_branch
      %30 = sbr.rel target = $region3
    $region8: #{tpu_custom_call.1} parent=1 // loop_exit
      _
    %2204 = vsyncpa [#allocation3], 1
    %s2205 = scalar_lea.sflag [#allocation3], 1
    %2206 = vsyncpa %s2205, 1
    %2207 = vsyncpa [#allocation6], 1
    %s2208 = scalar_lea.sflag [#allocation6], 1
    %2209 = vsyncpa %s2208, 1
    %2210 = vsyncpa [#allocation9], 1
    %s2211 = scalar_lea.sflag [#allocation9], 1
    %2212 = vsyncpa %s2211, 1
    %2213 = vsyncpa [#allocation4], 1
    %s2214 = scalar_lea.sflag [#allocation4], 1
    %2215 = vsyncpa %s2214, 1
    %2216 = vsyncpa [#allocation13], 1
    %s2217 = scalar_lea.sflag [#allocation13], 1
    %2218 = vsyncpa %s2217, 1

</llo_original>
